<compile_context>
chip_gen: v7x
topology: tpu7x:2x2x1
jax: 0.10.0
libtpu: 0.0.40
codegen_flags: <defaults>
</compile_context>

<pallas_src>
import math
import functools

import jax
import jax.numpy as jnp
from jax import lax
from jax.experimental import pallas as pl
from jax.experimental.pallas import tpu as pltpu


# ------------------------------ small helpers ------------------------------ #

def _up_flat(v):
    """(C, h, w) -> (C, (2h)*(2w)) nearest-2x upsample, flat row-major (row stride 2w)."""
    c, h, w = v.shape
    up = jnp.broadcast_to(v[:, :, None, :, None], (c, h, 2, w, 2))
    return up.reshape(c, 4 * h * w)


def _up_row_flat(v):
    """(C, 1, w) -> (C, 2w) width-duplicated single row."""
    c, _, w = v.shape
    up = jnp.broadcast_to(v[:, :, :, None], (c, 1, w, 2))
    return up.reshape(c, 2 * w)


def _pool_flat(v):
    """(C, 2h, w) -> (C, h*(w//2)) 2x2 mean pool (f32 math), flat row-major."""
    c, h2, w = v.shape
    p = v.astype(jnp.float32).reshape(c, h2 // 2, 2, w // 2, 2).sum(axis=(2, 4)) * 0.25
    return p.reshape(c, (h2 // 2) * (w // 2))


@functools.lru_cache(maxsize=None)
def _vmem_limit_bytes():
    """Generation-aware scoped-VMEM limit (v5e/v6e: 128 MiB, v7x: 64 MiB)."""
    cap = 64 * 1024 * 1024
    try:
        info = pltpu.get_tpu_info()
        cap = int(getattr(info, "vmem_capacity_bytes", cap))
    except Exception:
        pass
    return max(32 * 1024 * 1024, (cap * 3) // 4)


def _compiler_params(dims):
    return pltpu.CompilerParams(dimension_semantics=dims,
                                vmem_limit_bytes=_vmem_limit_bytes())


def _pick_group_tile(g, plane_bytes, target=2 << 20):
    """Largest channel-plane group CB (CB == G or CB % 8 == 0, CB | G) under ~target bytes."""
    cands = [d for d in range(1, g + 1) if g % d == 0 and (d == g or d % 8 == 0)]
    fitting = [d for d in cands if d * plane_bytes <= target]
    return max(fitting) if fitting else min(cands)


def _pick_cout_tile(cout):
    """Cout tile (<=128, multiple of 8 when tiled) so the f32 accumulator stays small."""
    if cout <= 128:
        return cout
    for t in (128, 64, 32, 16, 8):
        if cout % t == 0:
            return t
    return cout


def _pick_fused_row_tile(ho, wo, need_even, nt_cap):
    """Output-row tile TH: divides Ho; TH==Ho or TH*Wo % 128 == 0 (lane-dense out block);
    even for the upsample path; largest with TH*Wo <= nt_cap, else the smallest legal one."""
    valid = []
    for th in range(1, ho + 1):
        if ho % th:
            continue
        if need_even and th % 2 and th != ho:
            continue
        if th != ho and (th * wo) % 128:
            continue
        valid.append(th)
    fitting = [th for th in valid if th * wo <= nt_cap]
    return max(fitting) if fitting else min(valid)


# -------------------------- resample-only kernels --------------------------- #

def _upsample_only_kernel(x_ref, o_ref):
    # x_ref: (CB, H, W) -> o_ref: (CB, (2H)*(2W)) flat, lane-dense store
    o_ref[...] = _up_flat(x_ref[...]).astype(o_ref.dtype)


def _avgpool_only_kernel(x_ref, o_ref):
    # x_ref: (CB, H, W) -> o_ref: (CB, (H/2)*(W/2)) flat, lane-dense store
    o_ref[...] = _pool_flat(x_ref[...]).astype(o_ref.dtype)


def upsample2x_nchw(x):
    n, c, h, w = x.shape
    g = n * c
    ho, wo = 2 * h, 2 * w
    cb = _pick_group_tile(g, (h * w + ho * wo) * x.dtype.itemsize)
    out = pl.pallas_call(
        _upsample_only_kernel,
        out_shape=jax.ShapeDtypeStruct((g, ho * wo), x.dtype),
        grid=(g // cb,),
        in_specs=[pl.BlockSpec((cb, h, w), lambda i: (i, 0, 0))],
        out_specs=pl.BlockSpec((cb, ho * wo), lambda i: (i, 0)),
        compiler_params=_compiler_params(("parallel",)),
    )(x.reshape(g, h, w))
    return out.reshape(n, c, ho, wo)


def avgpool2x2_nchw(x):
    n, c, h, w = x.shape
    assert h % 2 == 0 and w % 2 == 0, "2x2 avg pool requires even H, W"
    g = n * c
    ho, wo = h // 2, w // 2
    cb = _pick_group_tile(g, (h * w + ho * wo) * x.dtype.itemsize)
    out = pl.pallas_call(
        _avgpool_only_kernel,
        out_shape=jax.ShapeDtypeStruct((g, ho * wo), x.dtype),
        grid=(g // cb,),
        in_specs=[pl.BlockSpec((cb, h, w), lambda i: (i, 0, 0))],
        out_specs=pl.BlockSpec((cb, ho * wo), lambda i: (i, 0)),
        compiler_params=_compiler_params(("parallel",)),
    )(x.reshape(g, h, w))
    return out.reshape(n, c, ho, wo)


# ----------------------- fused resample + 3x3 conv -------------------------- #

def _fused_resample_conv_kernel(x_ref, w_ref, b_ref, o_ref, flat_ref, patch_ref,
                                *, mode, th, wo):
    # x_ref    : (1, Cin, H, W)        full input image (resident across row/Cout tiles)
    # w_ref    : (TCout, 9*Cin)        im2col weights, input dtype
    # b_ref    : (TCout, 1)            f32 bias
    # o_ref    : (1, TCout, TH*Wo)     lane-dense output row tile
    # flat_ref : (Cin, (TH+2)*Wo + 2)  flat resampled tile + row halos, input dtype
    # patch_ref: (9*Cin, TH*Wo)        im2col patches, input dtype
    _, cin, h, w = x_ref.shape
    nt = th * wo
    r = pl.program_id(2)
    nr = pl.num_programs(2)
    cdt = flat_ref.dtype

    if mode == "upsample":
        half = th // 2
        s0 = pl.multiple_of(r * half, half)
        interior = _up_flat(x_ref[0, :, pl.ds(s0, half), :])               # (Cin, TH*Wo)
        # Halo rows: nearest-neighbour upsampling duplicates rows, so the single
        # source row (s0-1 / s0+half) is valid for both the odd top-halo row and
        # the even bottom-halo row.  A bilinear variant must NOT inherit this.
        top = _up_row_flat(x_ref[0, :, pl.ds(jnp.maximum(s0 - 1, 0), 1), :])
        bot = _up_row_flat(x_ref[0, :, pl.ds(jnp.minimum(s0 + half, h - 1), 1), :])
    else:  # downsample: fused 2x2 average pool ahead of the conv
        rows = 2 * th
        s0 = pl.multiple_of(r * rows, rows)
        interior = _pool_flat(x_ref[0, :, pl.ds(s0, rows), :])             # (Cin, TH*Wo)
        top = _pool_flat(x_ref[0, :, pl.ds(jnp.maximum(s0 - 2, 0), 2), :])
        bot = _pool_flat(x_ref[0, :, pl.ds(jnp.minimum(s0 + rows, h - 2), 2), :])

    # Zero the halo rows at the image top/bottom (sources read in-bounds, so a
    # simple scalar multiply mask is exact).
    top = top * (r > 0).astype(top.dtype)
    bot = bot * (r < nr - 1).astype(bot.dtype)

    # Flat scratch: row stride Wo, +1 column shift so every 3x3 tap window below
    # is an in-bounds contiguous lane slice.
    flat_ref[:, 0:1] = jnp.zeros((cin, 1), cdt)
    flat_ref[:, 1:1 + wo] = top.astype(cdt)
    flat_ref[:, 1 + wo:1 + wo + nt] = interior.astype(cdt)
    flat_ref[:, 1 + wo + nt:1 + 2 * wo + nt] = bot.astype(cdt)
    flat_ref[:, 1 + 2 * wo + nt:2 + 2 * wo + nt] = jnp.zeros((cin, 1), cdt)

    # im2col: 9 lane-shifted copies of the flat tile; the conv's left/right zero
    # padding is realised by masking the column that wrapped across a row edge.
    col = lax.broadcasted_iota(jnp.int32, (1, th, wo), 2).reshape(1, nt)
    for kh in range(3):
        for kw in range(3):
            tap = kh * 3 + kw
            start = kh * wo + kw
            win = flat_ref[:, start:start + nt]                            # (Cin, NT)
            if kw == 0:
                win = jnp.where(col != 0, win, jnp.zeros_like(win))
            elif kw == 2:
                win = jnp.where(col != wo - 1, win, jnp.zeros_like(win))
            patch_ref[tap * cin:(tap + 1) * cin, :] = win

    # Single MXU matmul (K = 9*Cin) + bias; acc is (TCout, NT) f32 (Cout-major,
    # so only ceil(TCout/8) * NT/128 vregs live).
    acc = jnp.dot(w_ref[...], patch_ref[...], preferred_element_type=jnp.float32)
    acc = acc + b_ref[...]
    o_ref[0] = acc.astype(o_ref.dtype)


def resample_conv_nchw(x, w2d, b, mode):
    # x: (N, Cin, H, W); w2d: (Cout, 9*Cin) with cols ordered [tap*Cin + ci],
    # tap = kh*3 + kw; b: (Cout, 1) f32.
    n, cin, h, w = x.shape
    cout = w2d.shape[0]
    if mode == "upsample":
        ho, wo = 2 * h, 2 * w
    else:
        assert h % 2 == 0 and w % 2 == 0, "2x2 avg pool requires even H, W"
        ho, wo = h // 2, w // 2

    tcout = _pick_cout_tile(cout)
    nt_cap = max(256, min(4096, (24 * 128 * 8) // tcout))    # ~24-vreg f32 accumulator
    th = _pick_fused_row_tile(ho, wo, mode == "upsample", nt_cap)
    nt = th * wo
    rt = ho // th
    ct = cout // tcout

    kernel = functools.partial(_fused_resample_conv_kernel, mode=mode, th=th, wo=wo)
    out = pl.pallas_call(
        kernel,
        out_shape=jax.ShapeDtypeStruct((n, cout, ho * wo), x.dtype),
        grid=(n, ct, rt),
        in_specs=[
            # Full image: block index constant along (ct, r) -> DMA'd once per image.
            pl.BlockSpec((1, cin, h, w), lambda i, j, k: (i, 0, 0, 0)),
            pl.BlockSpec((tcout, 9 * cin), lambda i, j, k: (j, 0)),
            pl.BlockSpec((tcout, 1), lambda i, j, k: (j, 0)),
        ],
        out_specs=pl.BlockSpec((1, tcout, nt), lambda i, j, k: (i, j, k)),
        scratch_shapes=[
            pltpu.VMEM((cin, (th + 2) * wo + 2), x.dtype),
            pltpu.VMEM((9 * cin, nt), x.dtype),
        ],
        compiler_params=_compiler_params(("parallel", "parallel", "parallel")),
    )(x, w2d.astype(x.dtype), b.astype(jnp.float32))
    return out.reshape(n, cout, ho, wo)


# ------------------------------- Module port -------------------------------- #

class UpDownSampler:
    """JAX/Pallas port of ldm UpDownSampler. Input/output are NCHW (no transposes)."""

    def __init__(self, inc, outc, mode, use_conv=False, padding=1, key=None):
        self.inc = inc
        self.outc = outc
        self.mode = mode
        self.use_conv = use_conv
        self.stride = 1 if mode == "upsample" else 2
        if use_conv:
            # TODO(synk): only padding=1 (SAME for 3x3) is implemented.
            assert padding == 1, "Pallas conv kernel implements padding=1 only"
            assert key is not None
            k_w, k_b = jax.random.split(key)
            fan_in = inc * 3 * 3
            bound = 1.0 / math.sqrt(fan_in)           # PyTorch Conv2d default init
            self.weight = jax.random.uniform(
                k_w, (3, 3, inc, outc), jnp.float32, -bound, bound)       # HWIO
            self.bias = jax.random.uniform(k_b, (outc,), jnp.float32, -bound, bound)
            # im2col weight layout: (Cout, 9*Cin), cols = tap*Cin + ci, tap = kh*3+kw
            self.w2d = self.weight.reshape(9, inc, outc).transpose(2, 0, 1).reshape(outc, 9 * inc)
            self.b2d = self.bias.reshape(outc, 1)

    def __call__(self, x_nchw):
        assert x_nchw.shape[1] == self.inc, (
            f"{x_nchw.shape[1]} and {self.inc} are not the same")
        if self.use_conv:
            return resample_conv_nchw(x_nchw, self.w2d, self.b2d, self.mode)
        if self.mode == "upsample":
            return upsample2x_nchw(x_nchw)
        return avgpool2x2_nchw(x_nchw)


# ------------------------------- Reference ---------------------------------- #

def reference(x_nchw, mode, use_conv, weight=None, bias=None):
    x = x_nchw
    if mode == "upsample":
        x = jnp.repeat(jnp.repeat(x, 2, axis=2), 2, axis=3)
    else:
        n, c, h, w = x.shape
        x = x.reshape(n, c, h // 2, 2, w // 2, 2).mean(axis=(3, 5))
    if use_conv:
        x = lax.conv_general_dilated(
            x, weight, window_strides=(1, 1), padding=((1, 1), (1, 1)),
            dimension_numbers=("NCHW", "HWIO", "NCHW"),
        ) + bias.reshape(1, -1, 1, 1)
    return x


# --------------------------------- Driver ----------------------------------- #

if __name__ == "__main__":
    key = jax.random.PRNGKey(0)
    k_x, k_x2, k_x3, k_up, k_down = jax.random.split(key, 5)

    N, C_IN, H, W = 2, 4, 16, 16
    C_OUT = 8
    x = jax.random.normal(k_x, (N, C_IN, H, W), jnp.float32)
    x2 = jax.random.normal(k_x2, (1, C_IN, 64, 64), jnp.float32)
    x3 = jax.random.normal(k_x3, (1, C_IN, 128, 128), jnp.float32)

    down = UpDownSampler(C_IN, C_OUT, mode="downsample", use_conv=True, key=k_down)
    up = UpDownSampler(C_IN, C_OUT, mode="upsample", use_conv=True, key=k_up)
    up_nc = UpDownSampler(C_IN, C_IN, mode="upsample", use_conv=False)
    down_nc = UpDownSampler(C_IN, C_IN, mode="downsample", use_conv=False)

    def check(got, want, tol=1e-5):
        assert got.shape == want.shape, (got.shape, want.shape)
        err = float(jnp.max(jnp.abs(got - want)))
        assert jnp.allclose(got, want, rtol=tol, atol=tol), err

    # fused resample + conv (single row tile per image)
    check(jax.block_until_ready(down(x)),
          reference(x, "downsample", True, down.weight, down.bias))
    check(jax.block_until_ready(up(x)),
          reference(x, "upsample", True, up.weight, up.bias))

    # resample only (lane-dense flat outputs)
    check(jax.block_until_ready(up_nc(x)), reference(x, "upsample", False), 1e-6)
    check(jax.block_until_ready(down_nc(x)), reference(x, "downsample", False), 1e-6)
    check(jax.block_until_ready(up_nc(x2)), reference(x2, "upsample", False), 1e-6)
    check(jax.block_until_ready(down_nc(x2)), reference(x2, "downsample", False), 1e-6)

    # larger feature maps: multiple row tiles per image, halo paths exercised
    check(jax.block_until_ready(down(x2)),
          reference(x2, "downsample", True, down.weight, down.bias))
    check(jax.block_until_ready(up(x2)),
          reference(x2, "upsample", True, up.weight, up.bias))
    check(jax.block_until_ready(down(x3)),
          reference(x3, "downsample", True, down.weight, down.bias))

    print("KERNEL_OK")
</pallas_src>

<mosaic_0001>
module attributes {stable_mosaic.version = 11 : i64} {
  func.func @_fused_resample_conv_kernel(%arg0: i32, %arg1: i32, %arg2: i32, %arg3: memref<1x4x16x16xf32, #tpu.memory_space<vmem>>, %arg4: memref<8x36xf32, #tpu.memory_space<vmem>>, %arg5: memref<8x1xf32, #tpu.memory_space<vmem>>, %arg6: memref<1x8x64xf32, #tpu.memory_space<vmem>>, %arg7: memref<4x82xf32, #tpu.memory_space<vmem>>, %arg8: memref<36x64xf32, #tpu.memory_space<vmem>>) attributes {dimension_semantics = [#tpu.dimension_semantics<parallel>, #tpu.dimension_semantics<parallel>, #tpu.dimension_semantics<parallel>], iteration_bounds = array<i64: 2, 1, 1>, scalar_prefetch = 0 : i64, scratch_operands = 2 : i64, tpu.core_type = #tpu.core_type<tc>, window_params = [{transform_indices = @transform_0, window_bounds = array<i64: 1, 4, 16, 16>}, {transform_indices = @transform_1, window_bounds = array<i64: 8, 36>}, {transform_indices = @transform_2, window_bounds = array<i64: 8, 1>}, {transform_indices = @transform_3, window_bounds = array<i64: 1, 8, 64>}]} {
    %c16_i32 = arith.constant 16 : i32
    %0 = arith.muli %arg2, %c16_i32 : i32
    %1 = tpu.assume_multiple %0, 16 : i32
    %c0 = arith.constant 0 : index
    %c0_0 = arith.constant 0 : index
    %2 = arith.index_cast %1 : i32 to index
    %c0_1 = arith.constant 0 : index
    %3 = vector.load %arg3[%c0, %c0_0, %2, %c0_1] : memref<1x4x16x16xf32, #tpu.memory_space<vmem>>, vector<1x4x16x16xf32>
    %4 = vector.shape_cast %3 : vector<1x4x16x16xf32> to vector<4x16x16xf32>
    %5 = vector.shape_cast %4 : vector<4x16x16xf32> to vector<4x8x2x8x2xf32>
    %cst = arith.constant dense<0.000000e+00> : vector<4x8x8xf32>
    %6 = vector.multi_reduction <add>, %5, %cst [2, 4] : vector<4x8x2x8x2xf32> to vector<4x8x8xf32>
    %cst_2 = arith.constant 2.500000e-01 : f32
    %7 = vector.broadcast %cst_2 : f32 to vector<4x8x8xf32>
    %8 = arith.mulf %6, %7 : vector<4x8x8xf32>
    %9 = vector.shape_cast %8 : vector<4x8x8xf32> to vector<4x64xf32>
    %c2_i32 = arith.constant 2 : i32
    %10 = arith.subi %1, %c2_i32 : i32
    %c0_i32 = arith.constant 0 : i32
    %11 = arith.maxsi %10, %c0_i32 : i32
    %c0_3 = arith.constant 0 : index
    %c0_4 = arith.constant 0 : index
    %12 = arith.index_cast %11 : i32 to index
    %c0_5 = arith.constant 0 : index
    %13 = vector.load %arg3[%c0_3, %c0_4, %12, %c0_5] : memref<1x4x16x16xf32, #tpu.memory_space<vmem>>, vector<1x4x2x16xf32>
    %14 = vector.shape_cast %13 : vector<1x4x2x16xf32> to vector<4x2x16xf32>
    %15 = vector.shape_cast %14 : vector<4x2x16xf32> to vector<4x1x2x8x2xf32>
    %cst_6 = arith.constant dense<0.000000e+00> : vector<4x1x8xf32>
    %16 = vector.multi_reduction <add>, %15, %cst_6 [2, 4] : vector<4x1x2x8x2xf32> to vector<4x1x8xf32>
    %cst_7 = arith.constant 2.500000e-01 : f32
    %17 = vector.broadcast %cst_7 : f32 to vector<4x1x8xf32>
    %18 = arith.mulf %16, %17 : vector<4x1x8xf32>
    %19 = vector.shape_cast %18 : vector<4x1x8xf32> to vector<4x8xf32>
    %c16_i32_8 = arith.constant 16 : i32
    %20 = arith.addi %1, %c16_i32_8 : i32
    %c14_i32 = arith.constant 14 : i32
    %21 = arith.minsi %20, %c14_i32 : i32
    %c0_9 = arith.constant 0 : index
    %c0_10 = arith.constant 0 : index
    %22 = arith.index_cast %21 : i32 to index
    %c0_11 = arith.constant 0 : index
    %23 = vector.load %arg3[%c0_9, %c0_10, %22, %c0_11] : memref<1x4x16x16xf32, #tpu.memory_space<vmem>>, vector<1x4x2x16xf32>
    %24 = vector.shape_cast %23 : vector<1x4x2x16xf32> to vector<4x2x16xf32>
    %25 = vector.shape_cast %24 : vector<4x2x16xf32> to vector<4x1x2x8x2xf32>
    %cst_12 = arith.constant dense<0.000000e+00> : vector<4x1x8xf32>
    %26 = vector.multi_reduction <add>, %25, %cst_12 [2, 4] : vector<4x1x2x8x2xf32> to vector<4x1x8xf32>
    %cst_13 = arith.constant 2.500000e-01 : f32
    %27 = vector.broadcast %cst_13 : f32 to vector<4x1x8xf32>
    %28 = arith.mulf %26, %27 : vector<4x1x8xf32>
    %29 = vector.shape_cast %28 : vector<4x1x8xf32> to vector<4x8xf32>
    %c0_i32_14 = arith.constant 0 : i32
    %30 = arith.cmpi sgt, %arg2, %c0_i32_14 : i32
    %31 = arith.extui %30 : i1 to i32
    %32 = arith.sitofp %31 : i32 to f32
    %33 = vector.broadcast %32 : f32 to vector<4x8xf32>
    %34 = arith.mulf %19, %33 : vector<4x8xf32>
    %c0_i32_15 = arith.constant 0 : i32
    %35 = arith.cmpi slt, %arg2, %c0_i32_15 : i32
    %36 = arith.extui %35 : i1 to i32
    %37 = arith.sitofp %36 : i32 to f32
    %38 = vector.broadcast %37 : f32 to vector<4x8xf32>
    %39 = arith.mulf %29, %38 : vector<4x8xf32>
    %cst_16 = arith.constant 0.000000e+00 : f32
    %40 = vector.broadcast %cst_16 : f32 to vector<4x1xf32>
    %c0_17 = arith.constant 0 : index
    %c0_18 = arith.constant 0 : index
    %41 = vector.load %arg7[%c0_17, %c0_18] : memref<4x82xf32, #tpu.memory_space<vmem>>, vector<4x1xf32>
    tpu.vector_store %arg7[%c0_17, %c0_18], %40 {strides = array<i32>} : memref<4x82xf32, #tpu.memory_space<vmem>>, vector<4x1xf32>,
    %c0_19 = arith.constant 0 : index
    %c1 = arith.constant 1 : index
    %42 = vector.load %arg7[%c0_19, %c1] : memref<4x82xf32, #tpu.memory_space<vmem>>, vector<4x8xf32>
    tpu.vector_store %arg7[%c0_19, %c1], %34 {strides = array<i32>} : memref<4x82xf32, #tpu.memory_space<vmem>>, vector<4x8xf32>,
    %c0_20 = arith.constant 0 : index
    %c9 = arith.constant 9 : index
    %43 = vector.load %arg7[%c0_20, %c9] : memref<4x82xf32, #tpu.memory_space<vmem>>, vector<4x64xf32>
    tpu.vector_store %arg7[%c0_20, %c9], %9 {strides = array<i32>} : memref<4x82xf32, #tpu.memory_space<vmem>>, vector<4x64xf32>,
    %c0_21 = arith.constant 0 : index
    %c73 = arith.constant 73 : index
    %44 = vector.load %arg7[%c0_21, %c73] : memref<4x82xf32, #tpu.memory_space<vmem>>, vector<4x8xf32>
    tpu.vector_store %arg7[%c0_21, %c73], %39 {strides = array<i32>} : memref<4x82xf32, #tpu.memory_space<vmem>>, vector<4x8xf32>,
    %cst_22 = arith.constant 0.000000e+00 : f32
    %45 = vector.broadcast %cst_22 : f32 to vector<4x1xf32>
    %c0_23 = arith.constant 0 : index
    %c81 = arith.constant 81 : index
    %46 = vector.load %arg7[%c0_23, %c81] : memref<4x82xf32, #tpu.memory_space<vmem>>, vector<4x1xf32>
    tpu.vector_store %arg7[%c0_23, %c81], %45 {strides = array<i32>} : memref<4x82xf32, #tpu.memory_space<vmem>>, vector<4x1xf32>,
    %47 = tpu.iota {dimensions = array<i32: 2>} : vector<1x8x8xi32>
    %48 = vector.shape_cast %47 : vector<1x8x8xi32> to vector<1x64xi32>
    %c0_24 = arith.constant 0 : index
    %c0_25 = arith.constant 0 : index
    %49 = vector.load %arg7[%c0_24, %c0_25] : memref<4x82xf32, #tpu.memory_space<vmem>>, vector<4x64xf32>
    %c0_i32_26 = arith.constant 0 : i32
    %50 = vector.broadcast %c0_i32_26 : i32 to vector<1x64xi32>
    %51 = arith.cmpi ne, %48, %50 : vector<1x64xi32>
    %cst_27 = arith.constant 0.000000e+00 : f32
    %52 = vector.broadcast %cst_27 : f32 to vector<4x64xf32>
    %53 = vector.shape_cast %51 : vector<1x64xi1> to vector<1x64xi1>
    %54 = vector.broadcast %53 : vector<1x64xi1> to vector<4x64xi1>
    %55 = arith.select %54, %49, %52 : vector<4x64xi1>, vector<4x64xf32>
    %c0_28 = arith.constant 0 : index
    %c0_29 = arith.constant 0 : index
    %56 = vector.load %arg8[%c0_28, %c0_29] : memref<36x64xf32, #tpu.memory_space<vmem>>, vector<4x64xf32>
    tpu.vector_store %arg8[%c0_28, %c0_29], %55 {strides = array<i32>} : memref<36x64xf32, #tpu.memory_space<vmem>>, vector<4x64xf32>,
    %c0_30 = arith.constant 0 : index
    %c1_31 = arith.constant 1 : index
    %57 = vector.load %arg7[%c0_30, %c1_31] : memref<4x82xf32, #tpu.memory_space<vmem>>, vector<4x64xf32>
    %c4 = arith.constant 4 : index
    %c0_32 = arith.constant 0 : index
    %58 = vector.load %arg8[%c4, %c0_32] : memref<36x64xf32, #tpu.memory_space<vmem>>, vector<4x64xf32>
    tpu.vector_store %arg8[%c4, %c0_32], %57 {strides = array<i32>} : memref<36x64xf32, #tpu.memory_space<vmem>>, vector<4x64xf32>,
    %c0_33 = arith.constant 0 : index
    %c2 = arith.constant 2 : index
    %59 = vector.load %arg7[%c0_33, %c2] : memref<4x82xf32, #tpu.memory_space<vmem>>, vector<4x64xf32>
    %c7_i32 = arith.constant 7 : i32
    %60 = vector.broadcast %c7_i32 : i32 to vector<1x64xi32>
    %61 = arith.cmpi ne, %48, %60 : vector<1x64xi32>
    %cst_34 = arith.constant 0.000000e+00 : f32
    %62 = vector.broadcast %cst_34 : f32 to vector<4x64xf32>
    %63 = vector.shape_cast %61 : vector<1x64xi1> to vector<1x64xi1>
    %64 = vector.broadcast %63 : vector<1x64xi1> to vector<4x64xi1>
    %65 = arith.select %64, %59, %62 : vector<4x64xi1>, vector<4x64xf32>
    %c8 = arith.constant 8 : index
    %c0_35 = arith.constant 0 : index
    %66 = vector.load %arg8[%c8, %c0_35] : memref<36x64xf32, #tpu.memory_space<vmem>>, vector<4x64xf32>
    tpu.vector_store %arg8[%c8, %c0_35], %65 {strides = array<i32>} : memref<36x64xf32, #tpu.memory_space<vmem>>, vector<4x64xf32>,
    %c0_36 = arith.constant 0 : index
    %c8_37 = arith.constant 8 : index
    %67 = vector.load %arg7[%c0_36, %c8_37] : memref<4x82xf32, #tpu.memory_space<vmem>>, vector<4x64xf32>
    %c0_i32_38 = arith.constant 0 : i32
    %68 = vector.broadcast %c0_i32_38 : i32 to vector<1x64xi32>
    %69 = arith.cmpi ne, %48, %68 : vector<1x64xi32>
    %cst_39 = arith.constant 0.000000e+00 : f32
    %70 = vector.broadcast %cst_39 : f32 to vector<4x64xf32>
    %71 = vector.shape_cast %69 : vector<1x64xi1> to vector<1x64xi1>
    %72 = vector.broadcast %71 : vector<1x64xi1> to vector<4x64xi1>
    %73 = arith.select %72, %67, %70 : vector<4x64xi1>, vector<4x64xf32>
    %c12 = arith.constant 12 : index
    %c0_40 = arith.constant 0 : index
    %74 = vector.load %arg8[%c12, %c0_40] : memref<36x64xf32, #tpu.memory_space<vmem>>, vector<4x64xf32>
    tpu.vector_store %arg8[%c12, %c0_40], %73 {strides = array<i32>} : memref<36x64xf32, #tpu.memory_space<vmem>>, vector<4x64xf32>,
    %c0_41 = arith.constant 0 : index
    %c9_42 = arith.constant 9 : index
    %75 = vector.load %arg7[%c0_41, %c9_42] : memref<4x82xf32, #tpu.memory_space<vmem>>, vector<4x64xf32>
    %c16 = arith.constant 16 : index
    %c0_43 = arith.constant 0 : index
    %76 = vector.load %arg8[%c16, %c0_43] : memref<36x64xf32, #tpu.memory_space<vmem>>, vector<4x64xf32>
    tpu.vector_store %arg8[%c16, %c0_43], %75 {strides = array<i32>} : memref<36x64xf32, #tpu.memory_space<vmem>>, vector<4x64xf32>,
    %c0_44 = arith.constant 0 : index
    %c10 = arith.constant 10 : index
    %77 = vector.load %arg7[%c0_44, %c10] : memref<4x82xf32, #tpu.memory_space<vmem>>, vector<4x64xf32>
    %c7_i32_45 = arith.constant 7 : i32
    %78 = vector.broadcast %c7_i32_45 : i32 to vector<1x64xi32>
    %79 = arith.cmpi ne, %48, %78 : vector<1x64xi32>
    %cst_46 = arith.constant 0.000000e+00 : f32
    %80 = vector.broadcast %cst_46 : f32 to vector<4x64xf32>
    %81 = vector.shape_cast %79 : vector<1x64xi1> to vector<1x64xi1>
    %82 = vector.broadcast %81 : vector<1x64xi1> to vector<4x64xi1>
    %83 = arith.select %82, %77, %80 : vector<4x64xi1>, vector<4x64xf32>
    %c20 = arith.constant 20 : index
    %c0_47 = arith.constant 0 : index
    %84 = vector.load %arg8[%c20, %c0_47] : memref<36x64xf32, #tpu.memory_space<vmem>>, vector<4x64xf32>
    tpu.vector_store %arg8[%c20, %c0_47], %83 {strides = array<i32>} : memref<36x64xf32, #tpu.memory_space<vmem>>, vector<4x64xf32>,
    %c0_48 = arith.constant 0 : index
    %c16_49 = arith.constant 16 : index
    %85 = vector.load %arg7[%c0_48, %c16_49] : memref<4x82xf32, #tpu.memory_space<vmem>>, vector<4x64xf32>
    %c0_i32_50 = arith.constant 0 : i32
    %86 = vector.broadcast %c0_i32_50 : i32 to vector<1x64xi32>
    %87 = arith.cmpi ne, %48, %86 : vector<1x64xi32>
    %cst_51 = arith.constant 0.000000e+00 : f32
    %88 = vector.broadcast %cst_51 : f32 to vector<4x64xf32>
    %89 = vector.shape_cast %87 : vector<1x64xi1> to vector<1x64xi1>
    %90 = vector.broadcast %89 : vector<1x64xi1> to vector<4x64xi1>
    %91 = arith.select %90, %85, %88 : vector<4x64xi1>, vector<4x64xf32>
    %c24 = arith.constant 24 : index
    %c0_52 = arith.constant 0 : index
    %92 = vector.load %arg8[%c24, %c0_52] : memref<36x64xf32, #tpu.memory_space<vmem>>, vector<4x64xf32>
    tpu.vector_store %arg8[%c24, %c0_52], %91 {strides = array<i32>} : memref<36x64xf32, #tpu.memory_space<vmem>>, vector<4x64xf32>,
    %c0_53 = arith.constant 0 : index
    %c17 = arith.constant 17 : index
    %93 = vector.load %arg7[%c0_53, %c17] : memref<4x82xf32, #tpu.memory_space<vmem>>, vector<4x64xf32>
    %c28 = arith.constant 28 : index
    %c0_54 = arith.constant 0 : index
    %94 = vector.load %arg8[%c28, %c0_54] : memref<36x64xf32, #tpu.memory_space<vmem>>, vector<4x64xf32>
    tpu.vector_store %arg8[%c28, %c0_54], %93 {strides = array<i32>} : memref<36x64xf32, #tpu.memory_space<vmem>>, vector<4x64xf32>,
    %c0_55 = arith.constant 0 : index
    %c18 = arith.constant 18 : index
    %95 = vector.load %arg7[%c0_55, %c18] : memref<4x82xf32, #tpu.memory_space<vmem>>, vector<4x64xf32>
    %c7_i32_56 = arith.constant 7 : i32
    %96 = vector.broadcast %c7_i32_56 : i32 to vector<1x64xi32>
    %97 = arith.cmpi ne, %48, %96 : vector<1x64xi32>
    %cst_57 = arith.constant 0.000000e+00 : f32
    %98 = vector.broadcast %cst_57 : f32 to vector<4x64xf32>
    %99 = vector.shape_cast %97 : vector<1x64xi1> to vector<1x64xi1>
    %100 = vector.broadcast %99 : vector<1x64xi1> to vector<4x64xi1>
    %101 = arith.select %100, %95, %98 : vector<4x64xi1>, vector<4x64xf32>
    %c32 = arith.constant 32 : index
    %c0_58 = arith.constant 0 : index
    %102 = vector.load %arg8[%c32, %c0_58] : memref<36x64xf32, #tpu.memory_space<vmem>>, vector<4x64xf32>
    tpu.vector_store %arg8[%c32, %c0_58], %101 {strides = array<i32>} : memref<36x64xf32, #tpu.memory_space<vmem>>, vector<4x64xf32>,
    %c0_59 = arith.constant 0 : index
    %c0_60 = arith.constant 0 : index
    %103 = vector.load %arg4[%c0_59, %c0_60] : memref<8x36xf32, #tpu.memory_space<vmem>>, vector<8x36xf32>
    %c0_61 = arith.constant 0 : index
    %c0_62 = arith.constant 0 : index
    %104 = vector.load %arg8[%c0_61, %c0_62] : memref<36x64xf32, #tpu.memory_space<vmem>>, vector<36x64xf32>
    %cst_63 = arith.constant dense<0.000000e+00> : vector<8x64xf32>
    %105 = tpu.matmul %103, %104, %cst_63 {dimension_numbers = #tpu.dot_dimension_numbers<[1], [0], [0], [1], [0, 0, 1, 1], [], []>} : vector<8x36xf32>, vector<36x64xf32>, vector<8x64xf32> -> vector<8x64xf32>
    %c0_64 = arith.constant 0 : index
    %c0_65 = arith.constant 0 : index
    %106 = vector.load %arg5[%c0_64, %c0_65] : memref<8x1xf32, #tpu.memory_space<vmem>>, vector<8x1xf32>
    %107 = vector.broadcast %106 : vector<8x1xf32> to vector<8x64xf32>
    %108 = arith.addf %105, %107 : vector<8x64xf32>
    %c0_66 = arith.constant 0 : index
    %c0_67 = arith.constant 0 : index
    %c0_68 = arith.constant 0 : index
    %109 = vector.load %arg6[%c0_66, %c0_67, %c0_68] : memref<1x8x64xf32, #tpu.memory_space<vmem>>, vector<1x8x64xf32>
    %110 = vector.shape_cast %109 : vector<1x8x64xf32> to vector<8x64xf32>
    %111 = vector.shape_cast %108 : vector<8x64xf32> to vector<1x8x64xf32>
    tpu.vector_store %arg6[%c0_66, %c0_67, %c0_68], %111 {strides = array<i32>} : memref<1x8x64xf32, #tpu.memory_space<vmem>>, vector<1x8x64xf32>,
    return
  }
  func.func @transform_0(%arg0: i32, %arg1: i32, %arg2: i32) -> (i32, i32, i32, i32) {
    %c0_i32 = arith.constant 0 : i32
    %c0_i32_0 = arith.constant 0 : i32
    %c0_i32_1 = arith.constant 0 : i32
    %c0_i32_2 = arith.constant 0 : i32
    return %arg0, %c0_i32, %c0_i32_0, %c0_i32_1 : i32, i32, i32, i32
  }
  func.func @transform_1(%arg0: i32, %arg1: i32, %arg2: i32) -> (i32, i32) {
    %c0_i32 = arith.constant 0 : i32
    %c0_i32_0 = arith.constant 0 : i32
    return %arg1, %c0_i32 : i32, i32
  }
  func.func @transform_2(%arg0: i32, %arg1: i32, %arg2: i32) -> (i32, i32) {
    %c0_i32 = arith.constant 0 : i32
    %c0_i32_0 = arith.constant 0 : i32
    return %arg1, %c0_i32 : i32, i32
  }
  func.func @transform_3(%arg0: i32, %arg1: i32, %arg2: i32) -> (i32, i32, i32) {
    %c0_i32 = arith.constant 0 : i32
    return %arg0, %arg1, %arg2 : i32, i32, i32
  }
}

</mosaic_0001>

<llo_original>
// kernel: tpu_custom_call.1
$region0: #{tpu_custom_call.1}
  #allocation0 [shape = 'u32[]', space=smem, size = 0x4, offset = 0x4, fixed_abs, tag = 'smem constant byte address 0x4 - core index']
  #allocation1 [shape = 'u32[144,128]{1,0:T(1,128)}', space=vmem, size = 0x12000, scoped, tag = 'internal scratch']
  #allocation2 [shape = 'f32[4,82]{1,0:T(4,128)}', space=vmem, size = 0x800, scoped, tag = 'scratch operand']
  #allocation3 [shape = 'f32[36,64]{1,0:T(8,128)}', space=vmem, size = 0x5000, scoped, tag = 'scratch operand']
  %s0 = inlined_call_operand.hbm [shape: f32[2,4,16,16], index: 0, kind: input, shape index: {}]
  %s1 = inlined_call_operand.vmem [shape: f32[8,36], index: 1, kind: input, shape index: {}]
  %s2 = inlined_call_operand.vmem [shape: f32[8,1], index: 2, kind: input, shape index: {}]
  %s3 = inlined_call_operand.hbm [shape: f32[2,8,64], index: 3, kind: output, shape index: {}]
  %s4 = sld [smem:[#allocation0]]
  $region49: #{tpu_custom_call.1} parent=0
    _
  %s6 = ssub.s32 1, %s4
  %s7 = scalar_select 0, %s6, %s4
  $region1: #{tpu_custom_call.1} parent=0
    #allocation4 [shape = 'u8[65536]{0}', space=vmem, size = 0x10000, scoped, tag = 'input window, operand 0']
    #allocation5 [shape = 's32[2]{0}', space=sflag, size = 0x8, scoped, tag = 'scoped memory for tpu_custom_call.1']
    #allocation6 [shape = 's32[2]{0}', space=sflag, size = 0x8, scoped, tag = 'scoped memory for tpu_custom_call.1']
    #allocation7 [shape = 'u8[8192]{0}', space=vmem, size = 0x2000, scoped, tag = 'output window, operand 0']
    %8 = vsyncpa [#allocation5], 0
    %s9 = scalar_lea.sflag [#allocation5], 1
    %10 = vsyncpa %s9, 0
    %11 = vsyncpa [#allocation6], 0
    %s12 = scalar_lea.sflag [#allocation6], 1
    %13 = vsyncpa %s12, 0
    loop: start=0, step=1, limit=4
    $region2: #{tpu_custom_call.1} parent=1 // loop_pre_header
      _
    $region3: #{tpu_custom_call.1} parent=1 // loop_header
      %s15 = sphi 0, %s19
      %p16 = scmp.ge.s32.totalorder %s15, 4
      %s22 = sphi 0, %s41
      %s23 = sphi 0, %s37
      %s24 = sphi 0, %s33
      %s25 = sphi 0, %s22
      %s26 = sphi 0, %s23
      %s27 = sphi 0, %s24
      %s28 = sphi 0, %s25
      %s29 = sphi 0, %s26
      %s30 = sphi 0, %s27
      %s44 = sphi 0, %s46
      %s47 = sphi 0, %s44
      %s48 = sphi 0, %s47
      %s64 = sphi 0, %s48
      %s70 = sphi 0, %s72
      %s73 = sphi 0, %s70
      %s74 = sphi 0, %s73
      %s90 = sphi 0, %s74
      %s96 = sphi 0, %s98
      %s99 = sphi 0, %s96
      %s100 = sphi 0, %s99
      %s116 = sphi 0, %s100
      %s126 = sphi 0, %s128
      %s129 = sphi 0, %s126
      %s130 = sphi 0, %s129
      %s146 = sphi 0, %s130
    $region4: #{tpu_custom_call.1} parent=1 // loop_header_branch
      %18 = sbr.rel (%p16) target = $region8
    $region5: #{tpu_custom_call.1} parent=1 // loop_body
      %s20 = ssub.s32 %s15, 1
      %s21 = ssub.s32 %s15, 2
      %s31 = sadd.s32 1, %s24
      %p32 = scmp.ge.s32.totalorder %s31, 1
      %s33 = scalar_select %p32, 0, %s31
      %s34 = sadd.s32 1, %s23
      %s35 = scalar_select %p32, %s34, %s23
      %p36 = scmp.ge.s32.totalorder %s35, 1
      %s37 = scalar_select %p36, 0, %s35
      %s38 = sadd.s32 1, %s22
      %s39 = scalar_select %p36, %s38, %s22
      %p40 = scmp.ge.s32.totalorder %s39, 2
      %s41 = scalar_select %p40, 0, %s39
      %s42 = ssub.s32 %s22, %s41
      %p43 = scmp.eq.s32.totalorder %s42, 0
      %s45 = sadd.s32 %s44, 1
      %s46 = scalar_select %p43, %s44, %s45
      %p49 = pneg %p43
      %p50 = scmp.eq.s32.totalorder %s15, 1
      %p51 = por %p49, %p50
      %p52 = scmp.ne.s32.totalorder %s44, %s47
      %p53 = scmp.eq.s32.totalorder %s15, 0
      %p54 = por %p52, %p53
      %p55 = scmp.ne.s32.totalorder %s44, %s47
      %p56 = scmp.eq.s32.totalorder %s20, 1
      %p57 = por %p55, %p56
      %p58 = scmp.ne.s32.totalorder %s47, %s48
      %p59 = scmp.eq.s32.totalorder %s20, 0
      %p60 = por %p58, %p59
      %p61 = scmp.ne.s32.totalorder %s47, %s48
      %p62 = scmp.eq.s32.totalorder %s21, 1
      %p63 = por %p61, %p62
      %p65 = scmp.ne.s32.totalorder %s48, %s64
      %p66 = scmp.eq.s32.totalorder %s21, 0
      %p67 = por %p65, %p66
      %s68 = ssub.s32 %s23, %s37
      %p69 = scmp.eq.s32.totalorder %s68, 0
      %s71 = sadd.s32 %s70, 1
      %s72 = scalar_select %p69, %s70, %s71
      %p75 = pneg %p69
      %p76 = scmp.eq.s32.totalorder %s15, 1
      %p77 = por %p75, %p76
      %p78 = scmp.ne.s32.totalorder %s70, %s73
      %p79 = scmp.eq.s32.totalorder %s15, 0
      %p80 = por %p78, %p79
      %p81 = scmp.ne.s32.totalorder %s70, %s73
      %p82 = scmp.eq.s32.totalorder %s20, 1
      %p83 = por %p81, %p82
      %p84 = scmp.ne.s32.totalorder %s73, %s74
      %p85 = scmp.eq.s32.totalorder %s20, 0
      %p86 = por %p84, %p85
      %p87 = scmp.ne.s32.totalorder %s73, %s74
      %p88 = scmp.eq.s32.totalorder %s21, 1
      %p89 = por %p87, %p88
      %p91 = scmp.ne.s32.totalorder %s74, %s90
      %p92 = scmp.eq.s32.totalorder %s21, 0
      %p93 = por %p91, %p92
      %s94 = ssub.s32 %s23, %s37
      %p95 = scmp.eq.s32.totalorder %s94, 0
      %s97 = sadd.s32 %s96, 1
      %s98 = scalar_select %p95, %s96, %s97
      %p101 = pneg %p95
      %p102 = scmp.eq.s32.totalorder %s15, 1
      %p103 = por %p101, %p102
      %p104 = scmp.ne.s32.totalorder %s96, %s99
      %p105 = scmp.eq.s32.totalorder %s15, 0
      %p106 = por %p104, %p105
      %p107 = scmp.ne.s32.totalorder %s96, %s99
      %p108 = scmp.eq.s32.totalorder %s20, 1
      %p109 = por %p107, %p108
      %p110 = scmp.ne.s32.totalorder %s99, %s100
      %p111 = scmp.eq.s32.totalorder %s20, 0
      %p112 = por %p110, %p111
      %p113 = scmp.ne.s32.totalorder %s99, %s100
      %p114 = scmp.eq.s32.totalorder %s21, 1
      %p115 = por %p113, %p114
      %p117 = scmp.ne.s32.totalorder %s100, %s116
      %p118 = scmp.eq.s32.totalorder %s21, 0
      %p119 = por %p117, %p118
      %s120 = ssub.s32 %s22, %s41
      %s121 = ssub.s32 %s23, %s37
      %s122 = sor.u32 %s120, %s121
      %s123 = ssub.s32 %s24, %s33
      %s124 = sor.u32 %s122, %s123
      %p125 = scmp.eq.s32.totalorder %s124, 0
      %s127 = sadd.s32 %s126, 1
      %s128 = scalar_select %p125, %s126, %s127
      %p131 = pneg %p125
      %p132 = scmp.eq.s32.totalorder %s15, 1
      %p133 = por %p131, %p132
      %p134 = scmp.ne.s32.totalorder %s126, %s129
      %p135 = scmp.eq.s32.totalorder %s15, 0
      %p136 = por %p134, %p135
      %p137 = scmp.ne.s32.totalorder %s126, %s129
      %p138 = scmp.eq.s32.totalorder %s20, 1
      %p139 = por %p137, %p138
      %p140 = scmp.ne.s32.totalorder %s129, %s130
      %p141 = scmp.eq.s32.totalorder %s20, 0
      %p142 = por %p140, %p141
      %p143 = scmp.ne.s32.totalorder %s129, %s130
      %p144 = scmp.eq.s32.totalorder %s21, 1
      %p145 = por %p143, %p144
      %p147 = scmp.ne.s32.totalorder %s130, %s146
      %p148 = scmp.eq.s32.totalorder %s21, 0
      %p149 = por %p147, %p148
      %p150 = scmp.le.s32.totalorder 1, %s15
      %p151 = scmp.lt.s32.totalorder %s15, 3
      %p152 = pnand %p150, %p151
      %p153 = pneg %p152
      // Predicated region
      $region9: #{tpu_custom_call.1} parent=5 // pred_check
        _
      $region10: #{tpu_custom_call.1} parent=5 // pred_check_branch
        %155 = sbr.rel (%p152) target = $region12
      $region11: #{tpu_custom_call.1} parent=5 // pred_region
        %s156 = ssub.s32 %s15, 1
        // Predicated region
        $region13: #{tpu_custom_call.1} parent=11 // pred_check
          %p157 = pneg %p86
        $region14: #{tpu_custom_call.1} parent=11 // pred_check_branch
          %159 = sbr.rel (%p157) target = $region16
        $region15: #{tpu_custom_call.1} parent=11 // pred_region
          %p160 = scmp.lt.s32.totalorder %s26, 0
          %s161 = scalar_select %p160, %s26, 0
          %s162 = smul.addr %s161, 8
          %s163 = scalar_lea.vmem %s1, %s162
        $region16: #{tpu_custom_call.1} parent=11 // pred_fallthru
          _
        // Predicated region
        $region17: #{tpu_custom_call.1} parent=11 // pred_check
          %p164 = pneg %p112
        $region18: #{tpu_custom_call.1} parent=11 // pred_check_branch
          %166 = sbr.rel (%p164) target = $region20
        $region19: #{tpu_custom_call.1} parent=11 // pred_region
          %p167 = scmp.lt.s32.totalorder %s26, 0
          %s168 = scalar_select %p167, %s26, 0
          %s169 = smul.addr %s168, 8
          %s170 = scalar_lea.vmem %s2, %s169
        $region20: #{tpu_custom_call.1} parent=11 // pred_fallthru
          _
      $region12: #{tpu_custom_call.1} parent=5 // pred_fallthru
        _
      %p171 = scmp.lt.s32.totalorder %s15, 2
      // Predicated region
      $region21: #{tpu_custom_call.1} parent=5 // pred_check
        %p172 = pneg %p171
      $region22: #{tpu_custom_call.1} parent=5 // pred_check_branch
        %174 = sbr.rel (%p172) target = $region24
      $region23: #{tpu_custom_call.1} parent=5 // pred_region
        // Predicated region
        $region25: #{tpu_custom_call.1} parent=23 // pred_check
          %p175 = pneg %p54
        $region26: #{tpu_custom_call.1} parent=23 // pred_check_branch
          %177 = sbr.rel (%p175) target = $region28
        $region27: #{tpu_custom_call.1} parent=23 // pred_region
          %s178 = sand.u32 %s44, 1
          %s179 = scalar_lea.sflag [#allocation5], %s178
          %s180 = sand.u32 %s44, 1
          %s181 = smul.addr %s180, 64
          %s182 = scalar_lea.vmem [#allocation4], %s181
          %s184 = ssub.s32 1024, 1024
          %185 = vsyncadd %s179, %s184
          %s186 = smul.addr %s22, 8
          %s187 = smul.addr %s186, 128
          %s188 = scalar_lea.hbm %s0, %s187
          %s189 = sshll.u32 %s182, 4
          %s190 = int_to_ptr.vmem [resolvable:$true] %s189
          %195 = dma.hbm_to_vmem [thread:$0]  %s188, 1024, %s190, %s179, 128, 128, 8
        $region28: #{tpu_custom_call.1} parent=23 // pred_fallthru
          _
      $region24: #{tpu_custom_call.1} parent=5 // pred_fallthru
        _
      %p196 = scmp.le.s32.totalorder 1, %s15
      %p197 = scmp.lt.s32.totalorder %s15, 3
      %p198 = pnand %p196, %p197
      %p199 = pneg %p198
      // Predicated region
      $region29: #{tpu_custom_call.1} parent=5 // pred_check
        _
      $region30: #{tpu_custom_call.1} parent=5 // pred_check_branch
        %201 = sbr.rel (%p198) target = $region32
      $region31: #{tpu_custom_call.1} parent=5 // pred_region
        %s202 = ssub.s32 %s15, 1
        %s203 = sand.u32 %s47, 1
        %s204 = scalar_lea.sflag [#allocation5], %s203
        %s205 = sand.u32 %s47, 1
        %s206 = smul.addr %s205, 64
        %s207 = scalar_lea.vmem [#allocation4], %s206
        // Predicated region
        $region33: #{tpu_custom_call.1} parent=31 // pred_check
          %p208 = pneg %p60
        $region34: #{tpu_custom_call.1} parent=31 // pred_check_branch
          %210 = sbr.rel (%p208) target = $region36
        $region35: #{tpu_custom_call.1} parent=31 // pred_region
          %211 = dma.done %s204, 1024
        $region36: #{tpu_custom_call.1} parent=31 // pred_fallthru
          _
        %s212 = sand.u32 %s47, 1
        %s213 = scalar_lea.sflag [#allocation5], %s212
        %s214 = sand.u32 %s47, 1
        %s215 = smul.addr %s214, 64
        %s216 = scalar_lea.vmem [#allocation4], %s215
        %p217 = pneg %p60
        %p218 = pneg %p57
        %p219 = scmp.lt.s32.totalorder %s26, 0
        %s220 = scalar_select %p219, %s26, 0
        %s221 = smul.addr %s220, 8
        %s222 = scalar_lea.vmem %s1, %s221
        %p223 = pneg %p86
        %p224 = pneg %p83
        %p225 = scmp.lt.s32.totalorder %s26, 0
        %s226 = scalar_select %p225, %s26, 0
        %s227 = smul.addr %s226, 8
        %s228 = scalar_lea.vmem %s2, %s227
        %p229 = pneg %p112
        %p230 = pneg %p109
        %p231 = pneg %p142
        %p232 = pneg %p139
        %s233 = sand.u32 %s129, 1
        %s234 = scalar_lea.sflag [#allocation6], %s233
        %s235 = sand.u32 %s129, 1
        %s236 = smul.addr %s235, 8
        %s237 = scalar_lea.vmem [#allocation7], %s236
        %p238 = scmp.lt.s32.totalorder %s26, 0
        %s239 = scalar_select %p238, %s26, 0
        %s240 = smul.addr %s239, 8
        %s241 = scalar_lea.vmem %s1, %s240
        %p242 = scmp.lt.s32.totalorder %s26, 0
        %s243 = scalar_select %p242, %s26, 0
        %s244 = smul.addr %s243, 8
        %s245 = scalar_lea.vmem %s2, %s244
        %s246 = smul.u32 %s27, 16
        %s247 = scalar_lea.vmem %s207, %s246 [#allocation4]
        %v248 = vld [vmem:[%s247] sm:$0xff]
        %v249 = vld [vmem:[%s247 + $0x8] sm:$0xff]
        %v250 = vld [vmem:[%s247 + $0x10] sm:$0xff]
        %v251 = vld [vmem:[%s247 + $0x18] sm:$0xff]
        %v252 = vld [vmem:[%s247 + $0x20] sm:$0xff]
        %v253 = vld [vmem:[%s247 + $0x28] sm:$0xff]
        %v254 = vld [vmem:[%s247 + $0x30] sm:$0xff]
        %v255 = vld [vmem:[%s247 + $0x38] sm:$0xff]
        %264 = vrot.lane.b32.xlu0 %v248, 126
        %v265 = vpop.permute.xlu0 %264
        %266 = vrot.lane.b32.xlu0 %v249, 126
        %v267 = vpop.permute.xlu0 %266
        %268 = vrot.lane.b32.xlu0 %v250, 126
        %v269 = vpop.permute.xlu0 %268
        %270 = vrot.lane.b32.xlu0 %v251, 126
        %v271 = vpop.permute.xlu0 %270
        %272 = vrot.lane.b32.xlu0 %v252, 126
        %v273 = vpop.permute.xlu0 %272
        %274 = vrot.lane.b32.xlu0 %v253, 126
        %v275 = vpop.permute.xlu0 %274
        %276 = vrot.lane.b32.xlu0 %v254, 126
        %v277 = vpop.permute.xlu0 %276
        %278 = vrot.lane.b32.xlu0 %v255, 126
        %v279 = vpop.permute.xlu0 %278
        %288 = vrot.lane.b32.xlu0 %v248, 124
        %v289 = vpop.permute.xlu0 %288
        %290 = vrot.lane.b32.xlu0 %v249, 124
        %v291 = vpop.permute.xlu0 %290
        %292 = vrot.lane.b32.xlu0 %v250, 124
        %v293 = vpop.permute.xlu0 %292
        %294 = vrot.lane.b32.xlu0 %v251, 124
        %v295 = vpop.permute.xlu0 %294
        %296 = vrot.lane.b32.xlu0 %v252, 124
        %v297 = vpop.permute.xlu0 %296
        %298 = vrot.lane.b32.xlu0 %v253, 124
        %v299 = vpop.permute.xlu0 %298
        %300 = vrot.lane.b32.xlu0 %v254, 124
        %v301 = vpop.permute.xlu0 %300
        %302 = vrot.lane.b32.xlu0 %v255, 124
        %v303 = vpop.permute.xlu0 %302
        %312 = vrot.lane.b32.xlu0 %v248, 122
        %v313 = vpop.permute.xlu0 %312
        %314 = vrot.lane.b32.xlu0 %v249, 122
        %v315 = vpop.permute.xlu0 %314
        %316 = vrot.lane.b32.xlu0 %v250, 122
        %v317 = vpop.permute.xlu0 %316
        %318 = vrot.lane.b32.xlu0 %v251, 122
        %v319 = vpop.permute.xlu0 %318
        %320 = vrot.lane.b32.xlu0 %v252, 122
        %v321 = vpop.permute.xlu0 %320
        %322 = vrot.lane.b32.xlu0 %v253, 122
        %v323 = vpop.permute.xlu0 %322
        %324 = vrot.lane.b32.xlu0 %v254, 122
        %v325 = vpop.permute.xlu0 %324
        %326 = vrot.lane.b32.xlu0 %v255, 122
        %v327 = vpop.permute.xlu0 %326
        %336 = vrot.lane.b32.xlu0 %v248, 120
        %v337 = vpop.permute.xlu0 %336
        %338 = vrot.lane.b32.xlu0 %v249, 120
        %v339 = vpop.permute.xlu0 %338
        %340 = vrot.lane.b32.xlu0 %v250, 120
        %v341 = vpop.permute.xlu0 %340
        %342 = vrot.lane.b32.xlu0 %v251, 120
        %v343 = vpop.permute.xlu0 %342
        %344 = vrot.lane.b32.xlu0 %v252, 120
        %v345 = vpop.permute.xlu0 %344
        %346 = vrot.lane.b32.xlu0 %v253, 120
        %v347 = vpop.permute.xlu0 %346
        %348 = vrot.lane.b32.xlu0 %v254, 120
        %v349 = vpop.permute.xlu0 %348
        %350 = vrot.lane.b32.xlu0 %v255, 120
        %v351 = vpop.permute.xlu0 %350
        %360 = vrot.lane.b32.xlu0 %v248, 118
        %v361 = vpop.permute.xlu0 %360
        %362 = vrot.lane.b32.xlu0 %v249, 118
        %v363 = vpop.permute.xlu0 %362
        %364 = vrot.lane.b32.xlu0 %v250, 118
        %v365 = vpop.permute.xlu0 %364
        %366 = vrot.lane.b32.xlu0 %v251, 118
        %v367 = vpop.permute.xlu0 %366
        %368 = vrot.lane.b32.xlu0 %v252, 118
        %v369 = vpop.permute.xlu0 %368
        %370 = vrot.lane.b32.xlu0 %v253, 118
        %v371 = vpop.permute.xlu0 %370
        %372 = vrot.lane.b32.xlu0 %v254, 118
        %v373 = vpop.permute.xlu0 %372
        %374 = vrot.lane.b32.xlu0 %v255, 118
        %v375 = vpop.permute.xlu0 %374
        %384 = vrot.lane.b32.xlu0 %v248, 116
        %v385 = vpop.permute.xlu0 %384
        %386 = vrot.lane.b32.xlu0 %v249, 116
        %v387 = vpop.permute.xlu0 %386
        %388 = vrot.lane.b32.xlu0 %v250, 116
        %v389 = vpop.permute.xlu0 %388
        %390 = vrot.lane.b32.xlu0 %v251, 116
        %v391 = vpop.permute.xlu0 %390
        %392 = vrot.lane.b32.xlu0 %v252, 116
        %v393 = vpop.permute.xlu0 %392
        %394 = vrot.lane.b32.xlu0 %v253, 116
        %v395 = vpop.permute.xlu0 %394
        %396 = vrot.lane.b32.xlu0 %v254, 116
        %v397 = vpop.permute.xlu0 %396
        %398 = vrot.lane.b32.xlu0 %v255, 116
        %v399 = vpop.permute.xlu0 %398
        %408 = vrot.lane.b32.xlu0 %v248, 114
        %v409 = vpop.permute.xlu0 %408
        %410 = vrot.lane.b32.xlu0 %v249, 114
        %v411 = vpop.permute.xlu0 %410
        %412 = vrot.lane.b32.xlu0 %v250, 114
        %v413 = vpop.permute.xlu0 %412
        %414 = vrot.lane.b32.xlu0 %v251, 114
        %v415 = vpop.permute.xlu0 %414
        %416 = vrot.lane.b32.xlu0 %v252, 114
        %v417 = vpop.permute.xlu0 %416
        %418 = vrot.lane.b32.xlu0 %v253, 114
        %v419 = vpop.permute.xlu0 %418
        %420 = vrot.lane.b32.xlu0 %v254, 114
        %v421 = vpop.permute.xlu0 %420
        %422 = vrot.lane.b32.xlu0 %v255, 114
        %v423 = vpop.permute.xlu0 %422
        %v432 = vcombine.low %v248, %v289
        %v433 = vcombine.high %v248, %v289
        %v435 = vunpack.c.l.s4 1983009808
        %v436 = vunpack.c.0.s8 %v435
        %v437 = vlaneseq
        %v438 = vshrl.u32 %v437, 7
        %v439 = vsub.s32 %v436, %v438
        %v440 = vrot.slane %v432, %v439
        %v442 = vunpack.c.l.s4 1983009808
        %v443 = vunpack.c.0.s8 %v442
        %v444 = vlaneseq
        %v445 = vshrl.u32 %v444, 7
        %v446 = vsub.s32 %v443, %v445
        %v447 = vrot.slane %v433, %v446
        %v448 = vcombine.low %v265, %v313
        %v449 = vcombine.high %v265, %v313
        %v451 = vunpack.c.l.s4 1983009808
        %v452 = vunpack.c.0.s8 %v451
        %v453 = vlaneseq
        %v454 = vshrl.u32 %v453, 7
        %v455 = vsub.s32 %v452, %v454
        %v456 = vrot.slane %v448, %v455
        %v458 = vunpack.c.l.s4 1983009808
        %v459 = vunpack.c.0.s8 %v458
        %v460 = vlaneseq
        %v461 = vshrl.u32 %v460, 7
        %v462 = vsub.s32 %v459, %v461
        %v463 = vrot.slane %v449, %v462
        %v464 = vcombine.low %v337, %v385
        %v465 = vcombine.high %v337, %v385
        %v467 = vunpack.c.l.s4 1983009808
        %v468 = vunpack.c.0.s8 %v467
        %v469 = vlaneseq
        %v470 = vshrl.u32 %v469, 7
        %v471 = vsub.s32 %v468, %v470
        %v472 = vrot.slane %v464, %v471
        %v474 = vunpack.c.l.s4 1983009808
        %v475 = vunpack.c.0.s8 %v474
        %v476 = vlaneseq
        %v477 = vshrl.u32 %v476, 7
        %v478 = vsub.s32 %v475, %v477
        %v479 = vrot.slane %v465, %v478
        %v480 = vcombine.low %v361, %v409
        %v481 = vcombine.high %v361, %v409
        %v483 = vunpack.c.l.s4 1983009808
        %v484 = vunpack.c.0.s8 %v483
        %v485 = vlaneseq
        %v486 = vshrl.u32 %v485, 7
        %v487 = vsub.s32 %v484, %v486
        %v488 = vrot.slane %v480, %v487
        %v490 = vunpack.c.l.s4 1983009808
        %v491 = vunpack.c.0.s8 %v490
        %v492 = vlaneseq
        %v493 = vshrl.u32 %v492, 7
        %v494 = vsub.s32 %v491, %v493
        %v495 = vrot.slane %v481, %v494
        %v496 = vcombine.low %v440, %v456
        %v497 = vcombine.high %v440, %v456
        %v499 = vunpack.c.l.s4 1934713408
        %v500 = vunpack.c.0.s8 %v499
        %v501 = vlaneseq
        %v502 = vshrl.u32 %v501, 7
        %v503 = vsub.s32 %v500, %v502
        %v504 = vrot.slane %v496, %v503
        %v506 = vunpack.c.l.s4 1934713408
        %v507 = vunpack.c.0.s8 %v506
        %v508 = vlaneseq
        %v509 = vshrl.u32 %v508, 7
        %v510 = vsub.s32 %v507, %v509
        %v511 = vrot.slane %v497, %v510
        %v512 = vcombine.low %v447, %v463
        %v513 = vcombine.high %v447, %v463
        %v515 = vunpack.c.l.s4 1934713408
        %v516 = vunpack.c.0.s8 %v515
        %v517 = vlaneseq
        %v518 = vshrl.u32 %v517, 7
        %v519 = vsub.s32 %v516, %v518
        %v520 = vrot.slane %v512, %v519
        %v522 = vunpack.c.l.s4 1934713408
        %v523 = vunpack.c.0.s8 %v522
        %v524 = vlaneseq
        %v525 = vshrl.u32 %v524, 7
        %v526 = vsub.s32 %v523, %v525
        %v527 = vrot.slane %v513, %v526
        %v528 = vcombine.low %v472, %v488
        %v529 = vcombine.high %v472, %v488
        %v531 = vunpack.c.l.s4 1934713408
        %v532 = vunpack.c.0.s8 %v531
        %v533 = vlaneseq
        %v534 = vshrl.u32 %v533, 7
        %v535 = vsub.s32 %v532, %v534
        %v536 = vrot.slane %v528, %v535
        %v538 = vunpack.c.l.s4 1934713408
        %v539 = vunpack.c.0.s8 %v538
        %v540 = vlaneseq
        %v541 = vshrl.u32 %v540, 7
        %v542 = vsub.s32 %v539, %v541
        %v543 = vrot.slane %v529, %v542
        %v544 = vcombine.low %v479, %v495
        %v545 = vcombine.high %v479, %v495
        %v547 = vunpack.c.l.s4 1934713408
        %v548 = vunpack.c.0.s8 %v547
        %v549 = vlaneseq
        %v550 = vshrl.u32 %v549, 7
        %v551 = vsub.s32 %v548, %v550
        %v552 = vrot.slane %v544, %v551
        %v554 = vunpack.c.l.s4 1934713408
        %v555 = vunpack.c.0.s8 %v554
        %v556 = vlaneseq
        %v557 = vshrl.u32 %v556, 7
        %v558 = vsub.s32 %v555, %v557
        %v559 = vrot.slane %v545, %v558
        %v560 = vcombine.low %v504, %v536
        %v561 = vcombine.high %v504, %v536
        %v562 = vcombine.low %v511, %v543
        %v563 = vcombine.high %v511, %v543
        %v564 = vcombine.low %v520, %v552
        %v565 = vcombine.high %v520, %v552
        %v566 = vcombine.low %v527, %v559
        %v567 = vcombine.high %v527, %v559
        %v568 = vcombine.low %v249, %v291
        %v569 = vcombine.high %v249, %v291
        %v571 = vunpack.c.l.s4 1983009808
        %v572 = vunpack.c.0.s8 %v571
        %v573 = vlaneseq
        %v574 = vshrl.u32 %v573, 7
        %v575 = vsub.s32 %v572, %v574
        %v576 = vrot.slane %v568, %v575
        %v578 = vunpack.c.l.s4 1983009808
        %v579 = vunpack.c.0.s8 %v578
        %v580 = vlaneseq
        %v581 = vshrl.u32 %v580, 7
        %v582 = vsub.s32 %v579, %v581
        %v583 = vrot.slane %v569, %v582
        %v584 = vcombine.low %v267, %v315
        %v585 = vcombine.high %v267, %v315
        %v587 = vunpack.c.l.s4 1983009808
        %v588 = vunpack.c.0.s8 %v587
        %v589 = vlaneseq
        %v590 = vshrl.u32 %v589, 7
        %v591 = vsub.s32 %v588, %v590
        %v592 = vrot.slane %v584, %v591
        %v594 = vunpack.c.l.s4 1983009808
        %v595 = vunpack.c.0.s8 %v594
        %v596 = vlaneseq
        %v597 = vshrl.u32 %v596, 7
        %v598 = vsub.s32 %v595, %v597
        %v599 = vrot.slane %v585, %v598
        %v600 = vcombine.low %v339, %v387
        %v601 = vcombine.high %v339, %v387
        %v603 = vunpack.c.l.s4 1983009808
        %v604 = vunpack.c.0.s8 %v603
        %v605 = vlaneseq
        %v606 = vshrl.u32 %v605, 7
        %v607 = vsub.s32 %v604, %v606
        %v608 = vrot.slane %v600, %v607
        %v610 = vunpack.c.l.s4 1983009808
        %v611 = vunpack.c.0.s8 %v610
        %v612 = vlaneseq
        %v613 = vshrl.u32 %v612, 7
        %v614 = vsub.s32 %v611, %v613
        %v615 = vrot.slane %v601, %v614
        %v616 = vcombine.low %v363, %v411
        %v617 = vcombine.high %v363, %v411
        %v619 = vunpack.c.l.s4 1983009808
        %v620 = vunpack.c.0.s8 %v619
        %v621 = vlaneseq
        %v622 = vshrl.u32 %v621, 7
        %v623 = vsub.s32 %v620, %v622
        %v624 = vrot.slane %v616, %v623
        %v626 = vunpack.c.l.s4 1983009808
        %v627 = vunpack.c.0.s8 %v626
        %v628 = vlaneseq
        %v629 = vshrl.u32 %v628, 7
        %v630 = vsub.s32 %v627, %v629
        %v631 = vrot.slane %v617, %v630
        %v632 = vcombine.low %v576, %v592
        %v633 = vcombine.high %v576, %v592
        %v635 = vunpack.c.l.s4 1934713408
        %v636 = vunpack.c.0.s8 %v635
        %v637 = vlaneseq
        %v638 = vshrl.u32 %v637, 7
        %v639 = vsub.s32 %v636, %v638
        %v640 = vrot.slane %v632, %v639
        %v642 = vunpack.c.l.s4 1934713408
        %v643 = vunpack.c.0.s8 %v642
        %v644 = vlaneseq
        %v645 = vshrl.u32 %v644, 7
        %v646 = vsub.s32 %v643, %v645
        %v647 = vrot.slane %v633, %v646
        %v648 = vcombine.low %v583, %v599
        %v649 = vcombine.high %v583, %v599
        %v651 = vunpack.c.l.s4 1934713408
        %v652 = vunpack.c.0.s8 %v651
        %v653 = vlaneseq
        %v654 = vshrl.u32 %v653, 7
        %v655 = vsub.s32 %v652, %v654
        %v656 = vrot.slane %v648, %v655
        %v658 = vunpack.c.l.s4 1934713408
        %v659 = vunpack.c.0.s8 %v658
        %v660 = vlaneseq
        %v661 = vshrl.u32 %v660, 7
        %v662 = vsub.s32 %v659, %v661
        %v663 = vrot.slane %v649, %v662
        %v664 = vcombine.low %v608, %v624
        %v665 = vcombine.high %v608, %v624
        %v667 = vunpack.c.l.s4 1934713408
        %v668 = vunpack.c.0.s8 %v667
        %v669 = vlaneseq
        %v670 = vshrl.u32 %v669, 7
        %v671 = vsub.s32 %v668, %v670
        %v672 = vrot.slane %v664, %v671
        %v674 = vunpack.c.l.s4 1934713408
        %v675 = vunpack.c.0.s8 %v674
        %v676 = vlaneseq
        %v677 = vshrl.u32 %v676, 7
        %v678 = vsub.s32 %v675, %v677
        %v679 = vrot.slane %v665, %v678
        %v680 = vcombine.low %v615, %v631
        %v681 = vcombine.high %v615, %v631
        %v683 = vunpack.c.l.s4 1934713408
        %v684 = vunpack.c.0.s8 %v683
        %v685 = vlaneseq
        %v686 = vshrl.u32 %v685, 7
        %v687 = vsub.s32 %v684, %v686
        %v688 = vrot.slane %v680, %v687
        %v690 = vunpack.c.l.s4 1934713408
        %v691 = vunpack.c.0.s8 %v690
        %v692 = vlaneseq
        %v693 = vshrl.u32 %v692, 7
        %v694 = vsub.s32 %v691, %v693
        %v695 = vrot.slane %v681, %v694
        %v696 = vcombine.low %v640, %v672
        %v697 = vcombine.high %v640, %v672
        %v698 = vcombine.low %v647, %v679
        %v699 = vcombine.high %v647, %v679
        %v700 = vcombine.low %v656, %v688
        %v701 = vcombine.high %v656, %v688
        %v702 = vcombine.low %v663, %v695
        %v703 = vcombine.high %v663, %v695
        %v704 = vcombine.low %v250, %v293
        %v705 = vcombine.high %v250, %v293
        %v707 = vunpack.c.l.s4 1983009808
        %v708 = vunpack.c.0.s8 %v707
        %v709 = vlaneseq
        %v710 = vshrl.u32 %v709, 7
        %v711 = vsub.s32 %v708, %v710
        %v712 = vrot.slane %v704, %v711
        %v714 = vunpack.c.l.s4 1983009808
        %v715 = vunpack.c.0.s8 %v714
        %v716 = vlaneseq
        %v717 = vshrl.u32 %v716, 7
        %v718 = vsub.s32 %v715, %v717
        %v719 = vrot.slane %v705, %v718
        %v720 = vcombine.low %v269, %v317
        %v721 = vcombine.high %v269, %v317
        %v723 = vunpack.c.l.s4 1983009808
        %v724 = vunpack.c.0.s8 %v723
        %v725 = vlaneseq
        %v726 = vshrl.u32 %v725, 7
        %v727 = vsub.s32 %v724, %v726
        %v728 = vrot.slane %v720, %v727
        %v730 = vunpack.c.l.s4 1983009808
        %v731 = vunpack.c.0.s8 %v730
        %v732 = vlaneseq
        %v733 = vshrl.u32 %v732, 7
        %v734 = vsub.s32 %v731, %v733
        %v735 = vrot.slane %v721, %v734
        %v736 = vcombine.low %v341, %v389
        %v737 = vcombine.high %v341, %v389
        %v739 = vunpack.c.l.s4 1983009808
        %v740 = vunpack.c.0.s8 %v739
        %v741 = vlaneseq
        %v742 = vshrl.u32 %v741, 7
        %v743 = vsub.s32 %v740, %v742
        %v744 = vrot.slane %v736, %v743
        %v746 = vunpack.c.l.s4 1983009808
        %v747 = vunpack.c.0.s8 %v746
        %v748 = vlaneseq
        %v749 = vshrl.u32 %v748, 7
        %v750 = vsub.s32 %v747, %v749
        %v751 = vrot.slane %v737, %v750
        %v752 = vcombine.low %v365, %v413
        %v753 = vcombine.high %v365, %v413
        %v755 = vunpack.c.l.s4 1983009808
        %v756 = vunpack.c.0.s8 %v755
        %v757 = vlaneseq
        %v758 = vshrl.u32 %v757, 7
        %v759 = vsub.s32 %v756, %v758
        %v760 = vrot.slane %v752, %v759
        %v762 = vunpack.c.l.s4 1983009808
        %v763 = vunpack.c.0.s8 %v762
        %v764 = vlaneseq
        %v765 = vshrl.u32 %v764, 7
        %v766 = vsub.s32 %v763, %v765
        %v767 = vrot.slane %v753, %v766
        %v768 = vcombine.low %v712, %v728
        %v769 = vcombine.high %v712, %v728
        %v771 = vunpack.c.l.s4 1934713408
        %v772 = vunpack.c.0.s8 %v771
        %v773 = vlaneseq
        %v774 = vshrl.u32 %v773, 7
        %v775 = vsub.s32 %v772, %v774
        %v776 = vrot.slane %v768, %v775
        %v778 = vunpack.c.l.s4 1934713408
        %v779 = vunpack.c.0.s8 %v778
        %v780 = vlaneseq
        %v781 = vshrl.u32 %v780, 7
        %v782 = vsub.s32 %v779, %v781
        %v783 = vrot.slane %v769, %v782
        %v784 = vcombine.low %v719, %v735
        %v785 = vcombine.high %v719, %v735
        %v787 = vunpack.c.l.s4 1934713408
        %v788 = vunpack.c.0.s8 %v787
        %v789 = vlaneseq
        %v790 = vshrl.u32 %v789, 7
        %v791 = vsub.s32 %v788, %v790
        %v792 = vrot.slane %v784, %v791
        %v794 = vunpack.c.l.s4 1934713408
        %v795 = vunpack.c.0.s8 %v794
        %v796 = vlaneseq
        %v797 = vshrl.u32 %v796, 7
        %v798 = vsub.s32 %v795, %v797
        %v799 = vrot.slane %v785, %v798
        %v800 = vcombine.low %v744, %v760
        %v801 = vcombine.high %v744, %v760
        %v803 = vunpack.c.l.s4 1934713408
        %v804 = vunpack.c.0.s8 %v803
        %v805 = vlaneseq
        %v806 = vshrl.u32 %v805, 7
        %v807 = vsub.s32 %v804, %v806
        %v808 = vrot.slane %v800, %v807
        %v810 = vunpack.c.l.s4 1934713408
        %v811 = vunpack.c.0.s8 %v810
        %v812 = vlaneseq
        %v813 = vshrl.u32 %v812, 7
        %v814 = vsub.s32 %v811, %v813
        %v815 = vrot.slane %v801, %v814
        %v816 = vcombine.low %v751, %v767
        %v817 = vcombine.high %v751, %v767
        %v819 = vunpack.c.l.s4 1934713408
        %v820 = vunpack.c.0.s8 %v819
        %v821 = vlaneseq
        %v822 = vshrl.u32 %v821, 7
        %v823 = vsub.s32 %v820, %v822
        %v824 = vrot.slane %v816, %v823
        %v826 = vunpack.c.l.s4 1934713408
        %v827 = vunpack.c.0.s8 %v826
        %v828 = vlaneseq
        %v829 = vshrl.u32 %v828, 7
        %v830 = vsub.s32 %v827, %v829
        %v831 = vrot.slane %v817, %v830
        %v832 = vcombine.low %v776, %v808
        %v833 = vcombine.high %v776, %v808
        %v834 = vcombine.low %v783, %v815
        %v835 = vcombine.high %v783, %v815
        %v836 = vcombine.low %v792, %v824
        %v837 = vcombine.high %v792, %v824
        %v838 = vcombine.low %v799, %v831
        %v839 = vcombine.high %v799, %v831
        %v840 = vcombine.low %v251, %v295
        %v841 = vcombine.high %v251, %v295
        %v843 = vunpack.c.l.s4 1983009808
        %v844 = vunpack.c.0.s8 %v843
        %v845 = vlaneseq
        %v846 = vshrl.u32 %v845, 7
        %v847 = vsub.s32 %v844, %v846
        %v848 = vrot.slane %v840, %v847
        %v850 = vunpack.c.l.s4 1983009808
        %v851 = vunpack.c.0.s8 %v850
        %v852 = vlaneseq
        %v853 = vshrl.u32 %v852, 7
        %v854 = vsub.s32 %v851, %v853
        %v855 = vrot.slane %v841, %v854
        %v856 = vcombine.low %v271, %v319
        %v857 = vcombine.high %v271, %v319
        %v859 = vunpack.c.l.s4 1983009808
        %v860 = vunpack.c.0.s8 %v859
        %v861 = vlaneseq
        %v862 = vshrl.u32 %v861, 7
        %v863 = vsub.s32 %v860, %v862
        %v864 = vrot.slane %v856, %v863
        %v866 = vunpack.c.l.s4 1983009808
        %v867 = vunpack.c.0.s8 %v866
        %v868 = vlaneseq
        %v869 = vshrl.u32 %v868, 7
        %v870 = vsub.s32 %v867, %v869
        %v871 = vrot.slane %v857, %v870
        %v872 = vcombine.low %v343, %v391
        %v873 = vcombine.high %v343, %v391
        %v875 = vunpack.c.l.s4 1983009808
        %v876 = vunpack.c.0.s8 %v875
        %v877 = vlaneseq
        %v878 = vshrl.u32 %v877, 7
        %v879 = vsub.s32 %v876, %v878
        %v880 = vrot.slane %v872, %v879
        %v882 = vunpack.c.l.s4 1983009808
        %v883 = vunpack.c.0.s8 %v882
        %v884 = vlaneseq
        %v885 = vshrl.u32 %v884, 7
        %v886 = vsub.s32 %v883, %v885
        %v887 = vrot.slane %v873, %v886
        %v888 = vcombine.low %v367, %v415
        %v889 = vcombine.high %v367, %v415
        %v891 = vunpack.c.l.s4 1983009808
        %v892 = vunpack.c.0.s8 %v891
        %v893 = vlaneseq
        %v894 = vshrl.u32 %v893, 7
        %v895 = vsub.s32 %v892, %v894
        %v896 = vrot.slane %v888, %v895
        %v898 = vunpack.c.l.s4 1983009808
        %v899 = vunpack.c.0.s8 %v898
        %v900 = vlaneseq
        %v901 = vshrl.u32 %v900, 7
        %v902 = vsub.s32 %v899, %v901
        %v903 = vrot.slane %v889, %v902
        %v904 = vcombine.low %v848, %v864
        %v905 = vcombine.high %v848, %v864
        %v907 = vunpack.c.l.s4 1934713408
        %v908 = vunpack.c.0.s8 %v907
        %v909 = vlaneseq
        %v910 = vshrl.u32 %v909, 7
        %v911 = vsub.s32 %v908, %v910
        %v912 = vrot.slane %v904, %v911
        %v914 = vunpack.c.l.s4 1934713408
        %v915 = vunpack.c.0.s8 %v914
        %v916 = vlaneseq
        %v917 = vshrl.u32 %v916, 7
        %v918 = vsub.s32 %v915, %v917
        %v919 = vrot.slane %v905, %v918
        %v920 = vcombine.low %v855, %v871
        %v921 = vcombine.high %v855, %v871
        %v923 = vunpack.c.l.s4 1934713408
        %v924 = vunpack.c.0.s8 %v923
        %v925 = vlaneseq
        %v926 = vshrl.u32 %v925, 7
        %v927 = vsub.s32 %v924, %v926
        %v928 = vrot.slane %v920, %v927
        %v930 = vunpack.c.l.s4 1934713408
        %v931 = vunpack.c.0.s8 %v930
        %v932 = vlaneseq
        %v933 = vshrl.u32 %v932, 7
        %v934 = vsub.s32 %v931, %v933
        %v935 = vrot.slane %v921, %v934
        %v936 = vcombine.low %v880, %v896
        %v937 = vcombine.high %v880, %v896
        %v939 = vunpack.c.l.s4 1934713408
        %v940 = vunpack.c.0.s8 %v939
        %v941 = vlaneseq
        %v942 = vshrl.u32 %v941, 7
        %v943 = vsub.s32 %v940, %v942
        %v944 = vrot.slane %v936, %v943
        %v946 = vunpack.c.l.s4 1934713408
        %v947 = vunpack.c.0.s8 %v946
        %v948 = vlaneseq
        %v949 = vshrl.u32 %v948, 7
        %v950 = vsub.s32 %v947, %v949
        %v951 = vrot.slane %v937, %v950
        %v952 = vcombine.low %v887, %v903
        %v953 = vcombine.high %v887, %v903
        %v955 = vunpack.c.l.s4 1934713408
        %v956 = vunpack.c.0.s8 %v955
        %v957 = vlaneseq
        %v958 = vshrl.u32 %v957, 7
        %v959 = vsub.s32 %v956, %v958
        %v960 = vrot.slane %v952, %v959
        %v962 = vunpack.c.l.s4 1934713408
        %v963 = vunpack.c.0.s8 %v962
        %v964 = vlaneseq
        %v965 = vshrl.u32 %v964, 7
        %v966 = vsub.s32 %v963, %v965
        %v967 = vrot.slane %v953, %v966
        %v968 = vcombine.low %v912, %v944
        %v969 = vcombine.high %v912, %v944
        %v970 = vcombine.low %v919, %v951
        %v971 = vcombine.high %v919, %v951
        %v972 = vcombine.low %v928, %v960
        %v973 = vcombine.high %v928, %v960
        %v974 = vcombine.low %v935, %v967
        %v975 = vcombine.high %v935, %v967
        %v976 = vcombine.low %v252, %v297
        %v977 = vcombine.high %v252, %v297
        %v979 = vunpack.c.l.s4 1983009808
        %v980 = vunpack.c.0.s8 %v979
        %v981 = vlaneseq
        %v982 = vshrl.u32 %v981, 7
        %v983 = vsub.s32 %v980, %v982
        %v984 = vrot.slane %v976, %v983
        %v986 = vunpack.c.l.s4 1983009808
        %v987 = vunpack.c.0.s8 %v986
        %v988 = vlaneseq
        %v989 = vshrl.u32 %v988, 7
        %v990 = vsub.s32 %v987, %v989
        %v991 = vrot.slane %v977, %v990
        %v992 = vcombine.low %v273, %v321
        %v993 = vcombine.high %v273, %v321
        %v995 = vunpack.c.l.s4 1983009808
        %v996 = vunpack.c.0.s8 %v995
        %v997 = vlaneseq
        %v998 = vshrl.u32 %v997, 7
        %v999 = vsub.s32 %v996, %v998
        %v1000 = vrot.slane %v992, %v999
        %v1002 = vunpack.c.l.s4 1983009808
        %v1003 = vunpack.c.0.s8 %v1002
        %v1004 = vlaneseq
        %v1005 = vshrl.u32 %v1004, 7
        %v1006 = vsub.s32 %v1003, %v1005
        %v1007 = vrot.slane %v993, %v1006
        %v1008 = vcombine.low %v345, %v393
        %v1009 = vcombine.high %v345, %v393
        %v1011 = vunpack.c.l.s4 1983009808
        %v1012 = vunpack.c.0.s8 %v1011
        %v1013 = vlaneseq
        %v1014 = vshrl.u32 %v1013, 7
        %v1015 = vsub.s32 %v1012, %v1014
        %v1016 = vrot.slane %v1008, %v1015
        %v1018 = vunpack.c.l.s4 1983009808
        %v1019 = vunpack.c.0.s8 %v1018
        %v1020 = vlaneseq
        %v1021 = vshrl.u32 %v1020, 7
        %v1022 = vsub.s32 %v1019, %v1021
        %v1023 = vrot.slane %v1009, %v1022
        %v1024 = vcombine.low %v369, %v417
        %v1025 = vcombine.high %v369, %v417
        %v1027 = vunpack.c.l.s4 1983009808
        %v1028 = vunpack.c.0.s8 %v1027
        %v1029 = vlaneseq
        %v1030 = vshrl.u32 %v1029, 7
        %v1031 = vsub.s32 %v1028, %v1030
        %v1032 = vrot.slane %v1024, %v1031
        %v1034 = vunpack.c.l.s4 1983009808
        %v1035 = vunpack.c.0.s8 %v1034
        %v1036 = vlaneseq
        %v1037 = vshrl.u32 %v1036, 7
        %v1038 = vsub.s32 %v1035, %v1037
        %v1039 = vrot.slane %v1025, %v1038
        %v1040 = vcombine.low %v984, %v1000
        %v1041 = vcombine.high %v984, %v1000
        %v1043 = vunpack.c.l.s4 1934713408
        %v1044 = vunpack.c.0.s8 %v1043
        %v1045 = vlaneseq
        %v1046 = vshrl.u32 %v1045, 7
        %v1047 = vsub.s32 %v1044, %v1046
        %v1048 = vrot.slane %v1040, %v1047
        %v1050 = vunpack.c.l.s4 1934713408
        %v1051 = vunpack.c.0.s8 %v1050
        %v1052 = vlaneseq
        %v1053 = vshrl.u32 %v1052, 7
        %v1054 = vsub.s32 %v1051, %v1053
        %v1055 = vrot.slane %v1041, %v1054
        %v1056 = vcombine.low %v991, %v1007
        %v1057 = vcombine.high %v991, %v1007
        %v1059 = vunpack.c.l.s4 1934713408
        %v1060 = vunpack.c.0.s8 %v1059
        %v1061 = vlaneseq
        %v1062 = vshrl.u32 %v1061, 7
        %v1063 = vsub.s32 %v1060, %v1062
        %v1064 = vrot.slane %v1056, %v1063
        %v1066 = vunpack.c.l.s4 1934713408
        %v1067 = vunpack.c.0.s8 %v1066
        %v1068 = vlaneseq
        %v1069 = vshrl.u32 %v1068, 7
        %v1070 = vsub.s32 %v1067, %v1069
        %v1071 = vrot.slane %v1057, %v1070
        %v1072 = vcombine.low %v1016, %v1032
        %v1073 = vcombine.high %v1016, %v1032
        %v1075 = vunpack.c.l.s4 1934713408
        %v1076 = vunpack.c.0.s8 %v1075
        %v1077 = vlaneseq
        %v1078 = vshrl.u32 %v1077, 7
        %v1079 = vsub.s32 %v1076, %v1078
        %v1080 = vrot.slane %v1072, %v1079
        %v1082 = vunpack.c.l.s4 1934713408
        %v1083 = vunpack.c.0.s8 %v1082
        %v1084 = vlaneseq
        %v1085 = vshrl.u32 %v1084, 7
        %v1086 = vsub.s32 %v1083, %v1085
        %v1087 = vrot.slane %v1073, %v1086
        %v1088 = vcombine.low %v1023, %v1039
        %v1089 = vcombine.high %v1023, %v1039
        %v1091 = vunpack.c.l.s4 1934713408
        %v1092 = vunpack.c.0.s8 %v1091
        %v1093 = vlaneseq
        %v1094 = vshrl.u32 %v1093, 7
        %v1095 = vsub.s32 %v1092, %v1094
        %v1096 = vrot.slane %v1088, %v1095
        %v1098 = vunpack.c.l.s4 1934713408
        %v1099 = vunpack.c.0.s8 %v1098
        %v1100 = vlaneseq
        %v1101 = vshrl.u32 %v1100, 7
        %v1102 = vsub.s32 %v1099, %v1101
        %v1103 = vrot.slane %v1089, %v1102
        %v1104 = vcombine.low %v1048, %v1080
        %v1105 = vcombine.high %v1048, %v1080
        %v1106 = vcombine.low %v1055, %v1087
        %v1107 = vcombine.high %v1055, %v1087
        %v1108 = vcombine.low %v1064, %v1096
        %v1109 = vcombine.high %v1064, %v1096
        %v1110 = vcombine.low %v1071, %v1103
        %v1111 = vcombine.high %v1071, %v1103
        %v1112 = vcombine.low %v253, %v299
        %v1113 = vcombine.high %v253, %v299
        %v1115 = vunpack.c.l.s4 1983009808
        %v1116 = vunpack.c.0.s8 %v1115
        %v1117 = vlaneseq
        %v1118 = vshrl.u32 %v1117, 7
        %v1119 = vsub.s32 %v1116, %v1118
        %v1120 = vrot.slane %v1112, %v1119
        %v1122 = vunpack.c.l.s4 1983009808
        %v1123 = vunpack.c.0.s8 %v1122
        %v1124 = vlaneseq
        %v1125 = vshrl.u32 %v1124, 7
        %v1126 = vsub.s32 %v1123, %v1125
        %v1127 = vrot.slane %v1113, %v1126
        %v1128 = vcombine.low %v275, %v323
        %v1129 = vcombine.high %v275, %v323
        %v1131 = vunpack.c.l.s4 1983009808
        %v1132 = vunpack.c.0.s8 %v1131
        %v1133 = vlaneseq
        %v1134 = vshrl.u32 %v1133, 7
        %v1135 = vsub.s32 %v1132, %v1134
        %v1136 = vrot.slane %v1128, %v1135
        %v1138 = vunpack.c.l.s4 1983009808
        %v1139 = vunpack.c.0.s8 %v1138
        %v1140 = vlaneseq
        %v1141 = vshrl.u32 %v1140, 7
        %v1142 = vsub.s32 %v1139, %v1141
        %v1143 = vrot.slane %v1129, %v1142
        %v1144 = vcombine.low %v347, %v395
        %v1145 = vcombine.high %v347, %v395
        %v1147 = vunpack.c.l.s4 1983009808
        %v1148 = vunpack.c.0.s8 %v1147
        %v1149 = vlaneseq
        %v1150 = vshrl.u32 %v1149, 7
        %v1151 = vsub.s32 %v1148, %v1150
        %v1152 = vrot.slane %v1144, %v1151
        %v1154 = vunpack.c.l.s4 1983009808
        %v1155 = vunpack.c.0.s8 %v1154
        %v1156 = vlaneseq
        %v1157 = vshrl.u32 %v1156, 7
        %v1158 = vsub.s32 %v1155, %v1157
        %v1159 = vrot.slane %v1145, %v1158
        %v1160 = vcombine.low %v371, %v419
        %v1161 = vcombine.high %v371, %v419
        %v1163 = vunpack.c.l.s4 1983009808
        %v1164 = vunpack.c.0.s8 %v1163
        %v1165 = vlaneseq
        %v1166 = vshrl.u32 %v1165, 7
        %v1167 = vsub.s32 %v1164, %v1166
        %v1168 = vrot.slane %v1160, %v1167
        %v1170 = vunpack.c.l.s4 1983009808
        %v1171 = vunpack.c.0.s8 %v1170
        %v1172 = vlaneseq
        %v1173 = vshrl.u32 %v1172, 7
        %v1174 = vsub.s32 %v1171, %v1173
        %v1175 = vrot.slane %v1161, %v1174
        %v1176 = vcombine.low %v1120, %v1136
        %v1177 = vcombine.high %v1120, %v1136
        %v1179 = vunpack.c.l.s4 1934713408
        %v1180 = vunpack.c.0.s8 %v1179
        %v1181 = vlaneseq
        %v1182 = vshrl.u32 %v1181, 7
        %v1183 = vsub.s32 %v1180, %v1182
        %v1184 = vrot.slane %v1176, %v1183
        %v1186 = vunpack.c.l.s4 1934713408
        %v1187 = vunpack.c.0.s8 %v1186
        %v1188 = vlaneseq
        %v1189 = vshrl.u32 %v1188, 7
        %v1190 = vsub.s32 %v1187, %v1189
        %v1191 = vrot.slane %v1177, %v1190
        %v1192 = vcombine.low %v1127, %v1143
        %v1193 = vcombine.high %v1127, %v1143
        %v1195 = vunpack.c.l.s4 1934713408
        %v1196 = vunpack.c.0.s8 %v1195
        %v1197 = vlaneseq
        %v1198 = vshrl.u32 %v1197, 7
        %v1199 = vsub.s32 %v1196, %v1198
        %v1200 = vrot.slane %v1192, %v1199
        %v1202 = vunpack.c.l.s4 1934713408
        %v1203 = vunpack.c.0.s8 %v1202
        %v1204 = vlaneseq
        %v1205 = vshrl.u32 %v1204, 7
        %v1206 = vsub.s32 %v1203, %v1205
        %v1207 = vrot.slane %v1193, %v1206
        %v1208 = vcombine.low %v1152, %v1168
        %v1209 = vcombine.high %v1152, %v1168
        %v1211 = vunpack.c.l.s4 1934713408
        %v1212 = vunpack.c.0.s8 %v1211
        %v1213 = vlaneseq
        %v1214 = vshrl.u32 %v1213, 7
        %v1215 = vsub.s32 %v1212, %v1214
        %v1216 = vrot.slane %v1208, %v1215
        %v1218 = vunpack.c.l.s4 1934713408
        %v1219 = vunpack.c.0.s8 %v1218
        %v1220 = vlaneseq
        %v1221 = vshrl.u32 %v1220, 7
        %v1222 = vsub.s32 %v1219, %v1221
        %v1223 = vrot.slane %v1209, %v1222
        %v1224 = vcombine.low %v1159, %v1175
        %v1225 = vcombine.high %v1159, %v1175
        %v1227 = vunpack.c.l.s4 1934713408
        %v1228 = vunpack.c.0.s8 %v1227
        %v1229 = vlaneseq
        %v1230 = vshrl.u32 %v1229, 7
        %v1231 = vsub.s32 %v1228, %v1230
        %v1232 = vrot.slane %v1224, %v1231
        %v1234 = vunpack.c.l.s4 1934713408
        %v1235 = vunpack.c.0.s8 %v1234
        %v1236 = vlaneseq
        %v1237 = vshrl.u32 %v1236, 7
        %v1238 = vsub.s32 %v1235, %v1237
        %v1239 = vrot.slane %v1225, %v1238
        %v1240 = vcombine.low %v1184, %v1216
        %v1241 = vcombine.high %v1184, %v1216
        %v1242 = vcombine.low %v1191, %v1223
        %v1243 = vcombine.high %v1191, %v1223
        %v1244 = vcombine.low %v1200, %v1232
        %v1245 = vcombine.high %v1200, %v1232
        %v1246 = vcombine.low %v1207, %v1239
        %v1247 = vcombine.high %v1207, %v1239
        %v1248 = vcombine.low %v254, %v301
        %v1249 = vcombine.high %v254, %v301
        %v1251 = vunpack.c.l.s4 1983009808
        %v1252 = vunpack.c.0.s8 %v1251
        %v1253 = vlaneseq
        %v1254 = vshrl.u32 %v1253, 7
        %v1255 = vsub.s32 %v1252, %v1254
        %v1256 = vrot.slane %v1248, %v1255
        %v1258 = vunpack.c.l.s4 1983009808
        %v1259 = vunpack.c.0.s8 %v1258
        %v1260 = vlaneseq
        %v1261 = vshrl.u32 %v1260, 7
        %v1262 = vsub.s32 %v1259, %v1261
        %v1263 = vrot.slane %v1249, %v1262
        %v1264 = vcombine.low %v277, %v325
        %v1265 = vcombine.high %v277, %v325
        %v1267 = vunpack.c.l.s4 1983009808
        %v1268 = vunpack.c.0.s8 %v1267
        %v1269 = vlaneseq
        %v1270 = vshrl.u32 %v1269, 7
        %v1271 = vsub.s32 %v1268, %v1270
        %v1272 = vrot.slane %v1264, %v1271
        %v1274 = vunpack.c.l.s4 1983009808
        %v1275 = vunpack.c.0.s8 %v1274
        %v1276 = vlaneseq
        %v1277 = vshrl.u32 %v1276, 7
        %v1278 = vsub.s32 %v1275, %v1277
        %v1279 = vrot.slane %v1265, %v1278
        %v1280 = vcombine.low %v349, %v397
        %v1281 = vcombine.high %v349, %v397
        %v1283 = vunpack.c.l.s4 1983009808
        %v1284 = vunpack.c.0.s8 %v1283
        %v1285 = vlaneseq
        %v1286 = vshrl.u32 %v1285, 7
        %v1287 = vsub.s32 %v1284, %v1286
        %v1288 = vrot.slane %v1280, %v1287
        %v1290 = vunpack.c.l.s4 1983009808
        %v1291 = vunpack.c.0.s8 %v1290
        %v1292 = vlaneseq
        %v1293 = vshrl.u32 %v1292, 7
        %v1294 = vsub.s32 %v1291, %v1293
        %v1295 = vrot.slane %v1281, %v1294
        %v1296 = vcombine.low %v373, %v421
        %v1297 = vcombine.high %v373, %v421
        %v1299 = vunpack.c.l.s4 1983009808
        %v1300 = vunpack.c.0.s8 %v1299
        %v1301 = vlaneseq
        %v1302 = vshrl.u32 %v1301, 7
        %v1303 = vsub.s32 %v1300, %v1302
        %v1304 = vrot.slane %v1296, %v1303
        %v1306 = vunpack.c.l.s4 1983009808
        %v1307 = vunpack.c.0.s8 %v1306
        %v1308 = vlaneseq
        %v1309 = vshrl.u32 %v1308, 7
        %v1310 = vsub.s32 %v1307, %v1309
        %v1311 = vrot.slane %v1297, %v1310
        %v1312 = vcombine.low %v1256, %v1272
        %v1313 = vcombine.high %v1256, %v1272
        %v1315 = vunpack.c.l.s4 1934713408
        %v1316 = vunpack.c.0.s8 %v1315
        %v1317 = vlaneseq
        %v1318 = vshrl.u32 %v1317, 7
        %v1319 = vsub.s32 %v1316, %v1318
        %v1320 = vrot.slane %v1312, %v1319
        %v1322 = vunpack.c.l.s4 1934713408
        %v1323 = vunpack.c.0.s8 %v1322
        %v1324 = vlaneseq
        %v1325 = vshrl.u32 %v1324, 7
        %v1326 = vsub.s32 %v1323, %v1325
        %v1327 = vrot.slane %v1313, %v1326
        %v1328 = vcombine.low %v1263, %v1279
        %v1329 = vcombine.high %v1263, %v1279
        %v1331 = vunpack.c.l.s4 1934713408
        %v1332 = vunpack.c.0.s8 %v1331
        %v1333 = vlaneseq
        %v1334 = vshrl.u32 %v1333, 7
        %v1335 = vsub.s32 %v1332, %v1334
        %v1336 = vrot.slane %v1328, %v1335
        %v1338 = vunpack.c.l.s4 1934713408
        %v1339 = vunpack.c.0.s8 %v1338
        %v1340 = vlaneseq
        %v1341 = vshrl.u32 %v1340, 7
        %v1342 = vsub.s32 %v1339, %v1341
        %v1343 = vrot.slane %v1329, %v1342
        %v1344 = vcombine.low %v1288, %v1304
        %v1345 = vcombine.high %v1288, %v1304
        %v1347 = vunpack.c.l.s4 1934713408
        %v1348 = vunpack.c.0.s8 %v1347
        %v1349 = vlaneseq
        %v1350 = vshrl.u32 %v1349, 7
        %v1351 = vsub.s32 %v1348, %v1350
        %v1352 = vrot.slane %v1344, %v1351
        %v1354 = vunpack.c.l.s4 1934713408
        %v1355 = vunpack.c.0.s8 %v1354
        %v1356 = vlaneseq
        %v1357 = vshrl.u32 %v1356, 7
        %v1358 = vsub.s32 %v1355, %v1357
        %v1359 = vrot.slane %v1345, %v1358
        %v1360 = vcombine.low %v1295, %v1311
        %v1361 = vcombine.high %v1295, %v1311
        %v1363 = vunpack.c.l.s4 1934713408
        %v1364 = vunpack.c.0.s8 %v1363
        %v1365 = vlaneseq
        %v1366 = vshrl.u32 %v1365, 7
        %v1367 = vsub.s32 %v1364, %v1366
        %v1368 = vrot.slane %v1360, %v1367
        %v1370 = vunpack.c.l.s4 1934713408
        %v1371 = vunpack.c.0.s8 %v1370
        %v1372 = vlaneseq
        %v1373 = vshrl.u32 %v1372, 7
        %v1374 = vsub.s32 %v1371, %v1373
        %v1375 = vrot.slane %v1361, %v1374
        %v1376 = vcombine.low %v1320, %v1352
        %v1377 = vcombine.high %v1320, %v1352
        %v1378 = vcombine.low %v1327, %v1359
        %v1379 = vcombine.high %v1327, %v1359
        %v1380 = vcombine.low %v1336, %v1368
        %v1381 = vcombine.high %v1336, %v1368
        %v1382 = vcombine.low %v1343, %v1375
        %v1383 = vcombine.high %v1343, %v1375
        %v1384 = vcombine.low %v255, %v303
        %v1385 = vcombine.high %v255, %v303
        %v1387 = vunpack.c.l.s4 1983009808
        %v1388 = vunpack.c.0.s8 %v1387
        %v1389 = vlaneseq
        %v1390 = vshrl.u32 %v1389, 7
        %v1391 = vsub.s32 %v1388, %v1390
        %v1392 = vrot.slane %v1384, %v1391
        %v1394 = vunpack.c.l.s4 1983009808
        %v1395 = vunpack.c.0.s8 %v1394
        %v1396 = vlaneseq
        %v1397 = vshrl.u32 %v1396, 7
        %v1398 = vsub.s32 %v1395, %v1397
        %v1399 = vrot.slane %v1385, %v1398
        %v1400 = vcombine.low %v279, %v327
        %v1401 = vcombine.high %v279, %v327
        %v1403 = vunpack.c.l.s4 1983009808
        %v1404 = vunpack.c.0.s8 %v1403
        %v1405 = vlaneseq
        %v1406 = vshrl.u32 %v1405, 7
        %v1407 = vsub.s32 %v1404, %v1406
        %v1408 = vrot.slane %v1400, %v1407
        %v1410 = vunpack.c.l.s4 1983009808
        %v1411 = vunpack.c.0.s8 %v1410
        %v1412 = vlaneseq
        %v1413 = vshrl.u32 %v1412, 7
        %v1414 = vsub.s32 %v1411, %v1413
        %v1415 = vrot.slane %v1401, %v1414
        %v1416 = vcombine.low %v351, %v399
        %v1417 = vcombine.high %v351, %v399
        %v1419 = vunpack.c.l.s4 1983009808
        %v1420 = vunpack.c.0.s8 %v1419
        %v1421 = vlaneseq
        %v1422 = vshrl.u32 %v1421, 7
        %v1423 = vsub.s32 %v1420, %v1422
        %v1424 = vrot.slane %v1416, %v1423
        %v1426 = vunpack.c.l.s4 1983009808
        %v1427 = vunpack.c.0.s8 %v1426
        %v1428 = vlaneseq
        %v1429 = vshrl.u32 %v1428, 7
        %v1430 = vsub.s32 %v1427, %v1429
        %v1431 = vrot.slane %v1417, %v1430
        %v1432 = vcombine.low %v375, %v423
        %v1433 = vcombine.high %v375, %v423
        %v1435 = vunpack.c.l.s4 1983009808
        %v1436 = vunpack.c.0.s8 %v1435
        %v1437 = vlaneseq
        %v1438 = vshrl.u32 %v1437, 7
        %v1439 = vsub.s32 %v1436, %v1438
        %v1440 = vrot.slane %v1432, %v1439
        %v1442 = vunpack.c.l.s4 1983009808
        %v1443 = vunpack.c.0.s8 %v1442
        %v1444 = vlaneseq
        %v1445 = vshrl.u32 %v1444, 7
        %v1446 = vsub.s32 %v1443, %v1445
        %v1447 = vrot.slane %v1433, %v1446
        %v1448 = vcombine.low %v1392, %v1408
        %v1449 = vcombine.high %v1392, %v1408
        %v1451 = vunpack.c.l.s4 1934713408
        %v1452 = vunpack.c.0.s8 %v1451
        %v1453 = vlaneseq
        %v1454 = vshrl.u32 %v1453, 7
        %v1455 = vsub.s32 %v1452, %v1454
        %v1456 = vrot.slane %v1448, %v1455
        %v1458 = vunpack.c.l.s4 1934713408
        %v1459 = vunpack.c.0.s8 %v1458
        %v1460 = vlaneseq
        %v1461 = vshrl.u32 %v1460, 7
        %v1462 = vsub.s32 %v1459, %v1461
        %v1463 = vrot.slane %v1449, %v1462
        %v1464 = vcombine.low %v1399, %v1415
        %v1465 = vcombine.high %v1399, %v1415
        %v1467 = vunpack.c.l.s4 1934713408
        %v1468 = vunpack.c.0.s8 %v1467
        %v1469 = vlaneseq
        %v1470 = vshrl.u32 %v1469, 7
        %v1471 = vsub.s32 %v1468, %v1470
        %v1472 = vrot.slane %v1464, %v1471
        %v1474 = vunpack.c.l.s4 1934713408
        %v1475 = vunpack.c.0.s8 %v1474
        %v1476 = vlaneseq
        %v1477 = vshrl.u32 %v1476, 7
        %v1478 = vsub.s32 %v1475, %v1477
        %v1479 = vrot.slane %v1465, %v1478
        %v1480 = vcombine.low %v1424, %v1440
        %v1481 = vcombine.high %v1424, %v1440
        %v1483 = vunpack.c.l.s4 1934713408
        %v1484 = vunpack.c.0.s8 %v1483
        %v1485 = vlaneseq
        %v1486 = vshrl.u32 %v1485, 7
        %v1487 = vsub.s32 %v1484, %v1486
        %v1488 = vrot.slane %v1480, %v1487
        %v1490 = vunpack.c.l.s4 1934713408
        %v1491 = vunpack.c.0.s8 %v1490
        %v1492 = vlaneseq
        %v1493 = vshrl.u32 %v1492, 7
        %v1494 = vsub.s32 %v1491, %v1493
        %v1495 = vrot.slane %v1481, %v1494
        %v1496 = vcombine.low %v1431, %v1447
        %v1497 = vcombine.high %v1431, %v1447
        %v1499 = vunpack.c.l.s4 1934713408
        %v1500 = vunpack.c.0.s8 %v1499
        %v1501 = vlaneseq
        %v1502 = vshrl.u32 %v1501, 7
        %v1503 = vsub.s32 %v1500, %v1502
        %v1504 = vrot.slane %v1496, %v1503
        %v1506 = vunpack.c.l.s4 1934713408
        %v1507 = vunpack.c.0.s8 %v1506
        %v1508 = vlaneseq
        %v1509 = vshrl.u32 %v1508, 7
        %v1510 = vsub.s32 %v1507, %v1509
        %v1511 = vrot.slane %v1497, %v1510
        %v1512 = vcombine.low %v1456, %v1488
        %v1513 = vcombine.high %v1456, %v1488
        %v1514 = vcombine.low %v1463, %v1495
        %v1515 = vcombine.high %v1463, %v1495
        %v1516 = vcombine.low %v1472, %v1504
        %v1517 = vcombine.high %v1472, %v1504
        %v1518 = vcombine.low %v1479, %v1511
        %v1519 = vcombine.high %v1479, %v1511
        %vm1520 = vcmask 15360
        %v1521 = vsel %vm1520, %v560, 0.0
        %v1522 = vsel %vm1520, %v561, 0.0
        %v1523 = vadd.f32 %v1521, %v1522
        %1524 = vadd.xlane.f32.xlu0 %v1523
        %v1525 = vpop.xlane.xlu0 %1524
        %v1526 = vsel %vm1520, %v562, 0.0
        %v1527 = vsel %vm1520, %v563, 0.0
        %v1528 = vadd.f32 %v1526, %v1527
        %1529 = vadd.xlane.f32.xlu0 %v1528
        %v1530 = vpop.xlane.xlu0 %1529
        %v1531 = vsel %vm1520, %v564, 0.0
        %v1532 = vsel %vm1520, %v565, 0.0
        %v1533 = vadd.f32 %v1531, %v1532
        %1534 = vadd.xlane.f32.xlu0 %v1533
        %v1535 = vpop.xlane.xlu0 %1534
        %v1536 = vsel %vm1520, %v566, 0.0
        %v1537 = vsel %vm1520, %v567, 0.0
        %v1538 = vadd.f32 %v1536, %v1537
        %1539 = vadd.xlane.f32.xlu0 %v1538
        %v1540 = vpop.xlane.xlu0 %1539
        %v1541 = vsel %vm1520, %v696, 0.0
        %v1542 = vsel %vm1520, %v697, 0.0
        %v1543 = vadd.f32 %v1541, %v1542
        %1544 = vadd.xlane.f32.xlu0 %v1543
        %v1545 = vpop.xlane.xlu0 %1544
        %v1546 = vsel %vm1520, %v698, 0.0
        %v1547 = vsel %vm1520, %v699, 0.0
        %v1548 = vadd.f32 %v1546, %v1547
        %1549 = vadd.xlane.f32.xlu0 %v1548
        %v1550 = vpop.xlane.xlu0 %1549
        %v1551 = vsel %vm1520, %v700, 0.0
        %v1552 = vsel %vm1520, %v701, 0.0
        %v1553 = vadd.f32 %v1551, %v1552
        %1554 = vadd.xlane.f32.xlu0 %v1553
        %v1555 = vpop.xlane.xlu0 %1554
        %v1556 = vsel %vm1520, %v702, 0.0
        %v1557 = vsel %vm1520, %v703, 0.0
        %v1558 = vadd.f32 %v1556, %v1557
        %1559 = vadd.xlane.f32.xlu0 %v1558
        %v1560 = vpop.xlane.xlu0 %1559
        %v1561 = vsel %vm1520, %v832, 0.0
        %v1562 = vsel %vm1520, %v833, 0.0
        %v1563 = vadd.f32 %v1561, %v1562
        %1564 = vadd.xlane.f32.xlu0 %v1563
        %v1565 = vpop.xlane.xlu0 %1564
        %v1566 = vsel %vm1520, %v834, 0.0
        %v1567 = vsel %vm1520, %v835, 0.0
        %v1568 = vadd.f32 %v1566, %v1567
        %1569 = vadd.xlane.f32.xlu0 %v1568
        %v1570 = vpop.xlane.xlu0 %1569
        %v1571 = vsel %vm1520, %v836, 0.0
        %v1572 = vsel %vm1520, %v837, 0.0
        %v1573 = vadd.f32 %v1571, %v1572
        %1574 = vadd.xlane.f32.xlu0 %v1573
        %v1575 = vpop.xlane.xlu0 %1574
        %v1576 = vsel %vm1520, %v838, 0.0
        %v1577 = vsel %vm1520, %v839, 0.0
        %v1578 = vadd.f32 %v1576, %v1577
        %1579 = vadd.xlane.f32.xlu0 %v1578
        %v1580 = vpop.xlane.xlu0 %1579
        %v1581 = vsel %vm1520, %v968, 0.0
        %v1582 = vsel %vm1520, %v969, 0.0
        %v1583 = vadd.f32 %v1581, %v1582
        %1584 = vadd.xlane.f32.xlu0 %v1583
        %v1585 = vpop.xlane.xlu0 %1584
        %v1586 = vsel %vm1520, %v970, 0.0
        %v1587 = vsel %vm1520, %v971, 0.0
        %v1588 = vadd.f32 %v1586, %v1587
        %1589 = vadd.xlane.f32.xlu0 %v1588
        %v1590 = vpop.xlane.xlu0 %1589
        %v1591 = vsel %vm1520, %v972, 0.0
        %v1592 = vsel %vm1520, %v973, 0.0
        %v1593 = vadd.f32 %v1591, %v1592
        %1594 = vadd.xlane.f32.xlu0 %v1593
        %v1595 = vpop.xlane.xlu0 %1594
        %v1596 = vsel %vm1520, %v974, 0.0
        %v1597 = vsel %vm1520, %v975, 0.0
        %v1598 = vadd.f32 %v1596, %v1597
        %1599 = vadd.xlane.f32.xlu0 %v1598
        %v1600 = vpop.xlane.xlu0 %1599
        %v1601 = vsel %vm1520, %v1104, 0.0
        %v1602 = vsel %vm1520, %v1105, 0.0
        %v1603 = vadd.f32 %v1601, %v1602
        %1604 = vadd.xlane.f32.xlu0 %v1603
        %v1605 = vpop.xlane.xlu0 %1604
        %v1606 = vsel %vm1520, %v1106, 0.0
        %v1607 = vsel %vm1520, %v1107, 0.0
        %v1608 = vadd.f32 %v1606, %v1607
        %1609 = vadd.xlane.f32.xlu0 %v1608
        %v1610 = vpop.xlane.xlu0 %1609
        %v1611 = vsel %vm1520, %v1108, 0.0
        %v1612 = vsel %vm1520, %v1109, 0.0
        %v1613 = vadd.f32 %v1611, %v1612
        %1614 = vadd.xlane.f32.xlu0 %v1613
        %v1615 = vpop.xlane.xlu0 %1614
        %v1616 = vsel %vm1520, %v1110, 0.0
        %v1617 = vsel %vm1520, %v1111, 0.0
        %v1618 = vadd.f32 %v1616, %v1617
        %1619 = vadd.xlane.f32.xlu0 %v1618
        %v1620 = vpop.xlane.xlu0 %1619
        %v1621 = vsel %vm1520, %v1240, 0.0
        %v1622 = vsel %vm1520, %v1241, 0.0
        %v1623 = vadd.f32 %v1621, %v1622
        %1624 = vadd.xlane.f32.xlu0 %v1623
        %v1625 = vpop.xlane.xlu0 %1624
        %v1626 = vsel %vm1520, %v1242, 0.0
        %v1627 = vsel %vm1520, %v1243, 0.0
        %v1628 = vadd.f32 %v1626, %v1627
        %1629 = vadd.xlane.f32.xlu0 %v1628
        %v1630 = vpop.xlane.xlu0 %1629
        %v1631 = vsel %vm1520, %v1244, 0.0
        %v1632 = vsel %vm1520, %v1245, 0.0
        %v1633 = vadd.f32 %v1631, %v1632
        %1634 = vadd.xlane.f32.xlu0 %v1633
        %v1635 = vpop.xlane.xlu0 %1634
        %v1636 = vsel %vm1520, %v1246, 0.0
        %v1637 = vsel %vm1520, %v1247, 0.0
        %v1638 = vadd.f32 %v1636, %v1637
        %1639 = vadd.xlane.f32.xlu0 %v1638
        %v1640 = vpop.xlane.xlu0 %1639
        %v1641 = vsel %vm1520, %v1376, 0.0
        %v1642 = vsel %vm1520, %v1377, 0.0
        %v1643 = vadd.f32 %v1641, %v1642
        %1644 = vadd.xlane.f32.xlu0 %v1643
        %v1645 = vpop.xlane.xlu0 %1644
        %v1646 = vsel %vm1520, %v1378, 0.0
        %v1647 = vsel %vm1520, %v1379, 0.0
        %v1648 = vadd.f32 %v1646, %v1647
        %1649 = vadd.xlane.f32.xlu0 %v1648
        %v1650 = vpop.xlane.xlu0 %1649
        %v1651 = vsel %vm1520, %v1380, 0.0
        %v1652 = vsel %vm1520, %v1381, 0.0
        %v1653 = vadd.f32 %v1651, %v1652
        %1654 = vadd.xlane.f32.xlu0 %v1653
        %v1655 = vpop.xlane.xlu0 %1654
        %v1656 = vsel %vm1520, %v1382, 0.0
        %v1657 = vsel %vm1520, %v1383, 0.0
        %v1658 = vadd.f32 %v1656, %v1657
        %1659 = vadd.xlane.f32.xlu0 %v1658
        %v1660 = vpop.xlane.xlu0 %1659
        %v1661 = vsel %vm1520, %v1512, 0.0
        %v1662 = vsel %vm1520, %v1513, 0.0
        %v1663 = vadd.f32 %v1661, %v1662
        %1664 = vadd.xlane.f32.xlu0 %v1663
        %v1665 = vpop.xlane.xlu0 %1664
        %v1666 = vsel %vm1520, %v1514, 0.0
        %v1667 = vsel %vm1520, %v1515, 0.0
        %v1668 = vadd.f32 %v1666, %v1667
        %1669 = vadd.xlane.f32.xlu0 %v1668
        %v1670 = vpop.xlane.xlu0 %1669
        %v1671 = vsel %vm1520, %v1516, 0.0
        %v1672 = vsel %vm1520, %v1517, 0.0
        %v1673 = vadd.f32 %v1671, %v1672
        %1674 = vadd.xlane.f32.xlu0 %v1673
        %v1675 = vpop.xlane.xlu0 %1674
        %v1676 = vsel %vm1520, %v1518, 0.0
        %v1677 = vsel %vm1520, %v1519, 0.0
        %v1678 = vadd.f32 %v1676, %v1677
        %1679 = vadd.xlane.f32.xlu0 %v1678
        %v1680 = vpop.xlane.xlu0 %1679
        %v1681 = vmul.f32 %v1525, 0.25
        %v1682 = vmul.f32 %v1530, 0.25
        %v1683 = vmul.f32 %v1535, 0.25
        %v1684 = vmul.f32 %v1540, 0.25
        %v1685 = vmul.f32 %v1545, 0.25
        %v1686 = vmul.f32 %v1550, 0.25
        %v1687 = vmul.f32 %v1555, 0.25
        %v1688 = vmul.f32 %v1560, 0.25
        %v1689 = vmul.f32 %v1565, 0.25
        %v1690 = vmul.f32 %v1570, 0.25
        %v1691 = vmul.f32 %v1575, 0.25
        %v1692 = vmul.f32 %v1580, 0.25
        %v1693 = vmul.f32 %v1585, 0.25
        %v1694 = vmul.f32 %v1590, 0.25
        %v1695 = vmul.f32 %v1595, 0.25
        %v1696 = vmul.f32 %v1600, 0.25
        %v1697 = vmul.f32 %v1605, 0.25
        %v1698 = vmul.f32 %v1610, 0.25
        %v1699 = vmul.f32 %v1615, 0.25
        %v1700 = vmul.f32 %v1620, 0.25
        %v1701 = vmul.f32 %v1625, 0.25
        %v1702 = vmul.f32 %v1630, 0.25
        %v1703 = vmul.f32 %v1635, 0.25
        %v1704 = vmul.f32 %v1640, 0.25
        %v1705 = vmul.f32 %v1645, 0.25
        %v1706 = vmul.f32 %v1650, 0.25
        %v1707 = vmul.f32 %v1655, 0.25
        %v1708 = vmul.f32 %v1660, 0.25
        %v1709 = vmul.f32 %v1665, 0.25
        %v1710 = vmul.f32 %v1670, 0.25
        %v1711 = vmul.f32 %v1675, 0.25
        %v1712 = vmul.f32 %v1680, 0.25
        %v1745 = vlaneseq
        %v1746 = vand.u32 %v1745, 127
        %v1747 = vlaneseq
        %v1748 = vshrl.u32 %v1747, 7
        %v1749 = vsub.s32 %v1746, %v1748
        %v1750 = vrot.slane %v1681, %v1749
        %v1751 = vlaneseq
        %v1752 = vshrl.u32 %v1751, 7
        %v1753 = vsub.s32 %v1746, %v1752
        %v1754 = vrot.slane %v1682, %v1753
        %v1755 = vlaneseq
        %v1756 = vshrl.u32 %v1755, 7
        %v1757 = vsub.s32 %v1746, %v1756
        %v1758 = vrot.slane %v1683, %v1757
        %v1759 = vlaneseq
        %v1760 = vshrl.u32 %v1759, 7
        %v1761 = vsub.s32 %v1746, %v1760
        %v1762 = vrot.slane %v1684, %v1761
        %v1763 = vlaneseq
        %v1764 = vshrl.u32 %v1763, 7
        %v1765 = vsub.s32 %v1746, %v1764
        %v1766 = vrot.slane %v1685, %v1765
        %v1767 = vlaneseq
        %v1768 = vshrl.u32 %v1767, 7
        %v1769 = vsub.s32 %v1746, %v1768
        %v1770 = vrot.slane %v1686, %v1769
        %v1771 = vlaneseq
        %v1772 = vshrl.u32 %v1771, 7
        %v1773 = vsub.s32 %v1746, %v1772
        %v1774 = vrot.slane %v1687, %v1773
        %v1775 = vlaneseq
        %v1776 = vshrl.u32 %v1775, 7
        %v1777 = vsub.s32 %v1746, %v1776
        %v1778 = vrot.slane %v1688, %v1777
        %v1779 = vlaneseq
        %v1780 = vshrl.u32 %v1779, 7
        %v1781 = vsub.s32 %v1746, %v1780
        %v1782 = vrot.slane %v1689, %v1781
        %v1783 = vlaneseq
        %v1784 = vshrl.u32 %v1783, 7
        %v1785 = vsub.s32 %v1746, %v1784
        %v1786 = vrot.slane %v1690, %v1785
        %v1787 = vlaneseq
        %v1788 = vshrl.u32 %v1787, 7
        %v1789 = vsub.s32 %v1746, %v1788
        %v1790 = vrot.slane %v1691, %v1789
        %v1791 = vlaneseq
        %v1792 = vshrl.u32 %v1791, 7
        %v1793 = vsub.s32 %v1746, %v1792
        %v1794 = vrot.slane %v1692, %v1793
        %v1795 = vlaneseq
        %v1796 = vshrl.u32 %v1795, 7
        %v1797 = vsub.s32 %v1746, %v1796
        %v1798 = vrot.slane %v1693, %v1797
        %v1799 = vlaneseq
        %v1800 = vshrl.u32 %v1799, 7
        %v1801 = vsub.s32 %v1746, %v1800
        %v1802 = vrot.slane %v1694, %v1801
        %v1803 = vlaneseq
        %v1804 = vshrl.u32 %v1803, 7
        %v1805 = vsub.s32 %v1746, %v1804
        %v1806 = vrot.slane %v1695, %v1805
        %v1807 = vlaneseq
        %v1808 = vshrl.u32 %v1807, 7
        %v1809 = vsub.s32 %v1746, %v1808
        %v1810 = vrot.slane %v1696, %v1809
        %v1811 = vlaneseq
        %v1812 = vshrl.u32 %v1811, 7
        %v1813 = vsub.s32 %v1746, %v1812
        %v1814 = vrot.slane %v1697, %v1813
        %v1815 = vlaneseq
        %v1816 = vshrl.u32 %v1815, 7
        %v1817 = vsub.s32 %v1746, %v1816
        %v1818 = vrot.slane %v1698, %v1817
        %v1819 = vlaneseq
        %v1820 = vshrl.u32 %v1819, 7
        %v1821 = vsub.s32 %v1746, %v1820
        %v1822 = vrot.slane %v1699, %v1821
        %v1823 = vlaneseq
        %v1824 = vshrl.u32 %v1823, 7
        %v1825 = vsub.s32 %v1746, %v1824
        %v1826 = vrot.slane %v1700, %v1825
        %v1827 = vlaneseq
        %v1828 = vshrl.u32 %v1827, 7
        %v1829 = vsub.s32 %v1746, %v1828
        %v1830 = vrot.slane %v1701, %v1829
        %v1831 = vlaneseq
        %v1832 = vshrl.u32 %v1831, 7
        %v1833 = vsub.s32 %v1746, %v1832
        %v1834 = vrot.slane %v1702, %v1833
        %v1835 = vlaneseq
        %v1836 = vshrl.u32 %v1835, 7
        %v1837 = vsub.s32 %v1746, %v1836
        %v1838 = vrot.slane %v1703, %v1837
        %v1839 = vlaneseq
        %v1840 = vshrl.u32 %v1839, 7
        %v1841 = vsub.s32 %v1746, %v1840
        %v1842 = vrot.slane %v1704, %v1841
        %v1843 = vlaneseq
        %v1844 = vshrl.u32 %v1843, 7
        %v1845 = vsub.s32 %v1746, %v1844
        %v1846 = vrot.slane %v1705, %v1845
        %v1847 = vlaneseq
        %v1848 = vshrl.u32 %v1847, 7
        %v1849 = vsub.s32 %v1746, %v1848
        %v1850 = vrot.slane %v1706, %v1849
        %v1851 = vlaneseq
        %v1852 = vshrl.u32 %v1851, 7
        %v1853 = vsub.s32 %v1746, %v1852
        %v1854 = vrot.slane %v1707, %v1853
        %v1855 = vlaneseq
        %v1856 = vshrl.u32 %v1855, 7
        %v1857 = vsub.s32 %v1746, %v1856
        %v1858 = vrot.slane %v1708, %v1857
        %v1859 = vlaneseq
        %v1860 = vshrl.u32 %v1859, 7
        %v1861 = vsub.s32 %v1746, %v1860
        %v1862 = vrot.slane %v1709, %v1861
        %v1863 = vlaneseq
        %v1864 = vshrl.u32 %v1863, 7
        %v1865 = vsub.s32 %v1746, %v1864
        %v1866 = vrot.slane %v1710, %v1865
        %v1867 = vlaneseq
        %v1868 = vshrl.u32 %v1867, 7
        %v1869 = vsub.s32 %v1746, %v1868
        %v1870 = vrot.slane %v1711, %v1869
        %v1871 = vlaneseq
        %v1872 = vshrl.u32 %v1871, 7
        %v1873 = vsub.s32 %v1746, %v1872
        %v1874 = vrot.slane %v1712, %v1873
        %vm1875 = vcmask 1041409
        %v1876 = vsel %vm1875, %v1754, %v1750
        %vm1877 = vcmask 1042434
        %v1878 = vsel %vm1877, %v1758, %v1876
        %vm1879 = vcmask 1043459
        %v1880 = vsel %vm1879, %v1762, %v1878
        %vm1881 = vcmask 1044484
        %v1882 = vsel %vm1881, %v1766, %v1880
        %vm1883 = vcmask 1045509
        %v1884 = vsel %vm1883, %v1770, %v1882
        %vm1885 = vcmask 1046534
        %v1886 = vsel %vm1885, %v1774, %v1884
        %vm1887 = vcmask 1047559
        %v1888 = vsel %vm1887, %v1778, %v1886
        %v1889 = vsel %vm1875, %v1786, %v1782
        %v1890 = vsel %vm1877, %v1790, %v1889
        %v1891 = vsel %vm1879, %v1794, %v1890
        %v1892 = vsel %vm1881, %v1798, %v1891
        %v1893 = vsel %vm1883, %v1802, %v1892
        %v1894 = vsel %vm1885, %v1806, %v1893
        %v1895 = vsel %vm1887, %v1810, %v1894
        %v1896 = vsel %vm1875, %v1818, %v1814
        %v1897 = vsel %vm1877, %v1822, %v1896
        %v1898 = vsel %vm1879, %v1826, %v1897
        %v1899 = vsel %vm1881, %v1830, %v1898
        %v1900 = vsel %vm1883, %v1834, %v1899
        %v1901 = vsel %vm1885, %v1838, %v1900
        %v1902 = vsel %vm1887, %v1842, %v1901
        %v1903 = vsel %vm1875, %v1850, %v1846
        %v1904 = vsel %vm1877, %v1854, %v1903
        %v1905 = vsel %vm1879, %v1858, %v1904
        %v1906 = vsel %vm1881, %v1862, %v1905
        %v1907 = vsel %vm1883, %v1866, %v1906
        %v1908 = vsel %vm1885, %v1870, %v1907
        %v1909 = vsel %vm1887, %v1874, %v1908
        %v1914 = vcombine.low %v1888, %v1902
        %v1915 = vcombine.high %v1888, %v1902
        %v1917 = vunpack.c.l.s4 1983009808
        %v1918 = vunpack.c.0.s8 %v1917
        %v1919 = vlaneseq
        %v1920 = vshrl.u32 %v1919, 7
        %v1921 = vsub.s32 %v1918, %v1920
        %v1922 = vrot.slane %v1914, %v1921
        %v1924 = vunpack.c.l.s4 1983009808
        %v1925 = vunpack.c.0.s8 %v1924
        %v1926 = vlaneseq
        %v1927 = vshrl.u32 %v1926, 7
        %v1928 = vsub.s32 %v1925, %v1927
        %v1929 = vrot.slane %v1915, %v1928
        %v1930 = vcombine.low %v1895, %v1909
        %v1931 = vcombine.high %v1895, %v1909
        %v1933 = vunpack.c.l.s4 1983009808
        %v1934 = vunpack.c.0.s8 %v1933
        %v1935 = vlaneseq
        %v1936 = vshrl.u32 %v1935, 7
        %v1937 = vsub.s32 %v1934, %v1936
        %v1938 = vrot.slane %v1930, %v1937
        %v1940 = vunpack.c.l.s4 1983009808
        %v1941 = vunpack.c.0.s8 %v1940
        %v1942 = vlaneseq
        %v1943 = vshrl.u32 %v1942, 7
        %v1944 = vsub.s32 %v1941, %v1943
        %v1945 = vrot.slane %v1931, %v1944
        %v1946 = vcombine.low %v1922, %v1938
        %v1947 = vcombine.high %v1922, %v1938
        %v1949 = vunpack.c.l.s4 1934713408
        %v1950 = vunpack.c.0.s8 %v1949
        %v1951 = vlaneseq
        %v1952 = vshrl.u32 %v1951, 7
        %v1953 = vsub.s32 %v1950, %v1952
        %v1954 = vrot.slane %v1946, %v1953
        %v1956 = vunpack.c.l.s4 1934713408
        %v1957 = vunpack.c.0.s8 %v1956
        %v1958 = vlaneseq
        %v1959 = vshrl.u32 %v1958, 7
        %v1960 = vsub.s32 %v1957, %v1959
        %v1961 = vrot.slane %v1947, %v1960
        %v1962 = vcombine.low %v1929, %v1945
        %v1963 = vcombine.high %v1929, %v1945
        %v1965 = vunpack.c.l.s4 1934713408
        %v1966 = vunpack.c.0.s8 %v1965
        %v1967 = vlaneseq
        %v1968 = vshrl.u32 %v1967, 7
        %v1969 = vsub.s32 %v1966, %v1968
        %v1970 = vrot.slane %v1962, %v1969
        %v1972 = vunpack.c.l.s4 1934713408
        %v1973 = vunpack.c.0.s8 %v1972
        %v1974 = vlaneseq
        %v1975 = vshrl.u32 %v1974, 7
        %v1976 = vsub.s32 %v1973, %v1975
        %v1977 = vrot.slane %v1963, %v1976
        %v1978 = vcombine.high %v1954, 0.0
        %v1979 = vcombine.high %v1961, 0.0
        %v1980 = vcombine.high %v1970, 0.0
        %v1981 = vcombine.high %v1977, 0.0
        %1983 = vrot.lane.b32.xlu0 %v1978, 8
        %v1984 = vpop.permute.xlu0 %1983
        %1987 = vrot.lane.b32.xlu0 %v1961, 16
        %v1988 = vpop.permute.xlu0 %1987
        %1991 = vrot.lane.b32.xlu0 %v1979, 24
        %v1992 = vpop.permute.xlu0 %1991
        %1995 = vrot.lane.b32.xlu0 %v1970, 32
        %v1996 = vpop.permute.xlu0 %1995
        %1999 = vrot.lane.b32.xlu0 %v1980, 40
        %v2000 = vpop.permute.xlu0 %1999
        %2003 = vrot.lane.b32.xlu0 %v1977, 48
        %v2004 = vpop.permute.xlu0 %2003
        %2007 = vrot.lane.b32.xlu0 %v1981, 56
        %v2008 = vpop.permute.xlu0 %2007
        %vm2010 = vcmask 64512
        %v2011 = vsel %vm2010, %v1954, %v1984
        %vm2012 = vcmask 130048
        %v2013 = vsel %vm2012, %v2011, %v1988
        %vm2014 = vcmask 195584
        %v2015 = vsel %vm2014, %v2013, %v1992
        %vm2016 = vcmask 261120
        %v2017 = vsel %vm2016, %v2015, %v1996
        %vm2018 = vcmask 326656
        %v2019 = vsel %vm2018, %v2017, %v2000
        %vm2020 = vcmask 392192
        %v2021 = vsel %vm2020, %v2019, %v2004
        %vm2022 = vcmask 457728
        %v2023 = vsel %vm2022, %v2021, %v2008
        %s2024 = ssub.s32 %s246, 2
        %p2025 = scmp.gt.s32.totalorder %s2024, 0
        %s2026 = scalar_select %p2025, %s2024, 0
        %s2027 = scalar_lea.vmem %s207, %s2026 [#allocation4]
        %v2028 = vld [vmem:[%s2027] sm:$0x3]
        %v2029 = vld [vmem:[%s2027 + $0x10] sm:$0x3]
        %v2030 = vld [vmem:[%s2027 + $0x20] sm:$0x3]
        %v2031 = vld [vmem:[%s2027 + $0x30] sm:$0x3]
        %2036 = vrot.lane.b32.xlu0 %v2028, 126
        %v2037 = vpop.permute.xlu0 %2036
        %2038 = vrot.lane.b32.xlu0 %v2029, 126
        %v2039 = vpop.permute.xlu0 %2038
        %2040 = vrot.lane.b32.xlu0 %v2030, 126
        %v2041 = vpop.permute.xlu0 %2040
        %2042 = vrot.lane.b32.xlu0 %v2031, 126
        %v2043 = vpop.permute.xlu0 %2042
        %2048 = vrot.lane.b32.xlu0 %v2028, 124
        %v2049 = vpop.permute.xlu0 %2048
        %2050 = vrot.lane.b32.xlu0 %v2029, 124
        %v2051 = vpop.permute.xlu0 %2050
        %2052 = vrot.lane.b32.xlu0 %v2030, 124
        %v2053 = vpop.permute.xlu0 %2052
        %2054 = vrot.lane.b32.xlu0 %v2031, 124
        %v2055 = vpop.permute.xlu0 %2054
        %2060 = vrot.lane.b32.xlu0 %v2028, 122
        %v2061 = vpop.permute.xlu0 %2060
        %2062 = vrot.lane.b32.xlu0 %v2029, 122
        %v2063 = vpop.permute.xlu0 %2062
        %2064 = vrot.lane.b32.xlu0 %v2030, 122
        %v2065 = vpop.permute.xlu0 %2064
        %2066 = vrot.lane.b32.xlu0 %v2031, 122
        %v2067 = vpop.permute.xlu0 %2066
        %2072 = vrot.lane.b32.xlu0 %v2028, 120
        %v2073 = vpop.permute.xlu0 %2072
        %2074 = vrot.lane.b32.xlu0 %v2029, 120
        %v2075 = vpop.permute.xlu0 %2074
        %2076 = vrot.lane.b32.xlu0 %v2030, 120
        %v2077 = vpop.permute.xlu0 %2076
        %2078 = vrot.lane.b32.xlu0 %v2031, 120
        %v2079 = vpop.permute.xlu0 %2078
        %2084 = vrot.lane.b32.xlu0 %v2028, 118
        %v2085 = vpop.permute.xlu0 %2084
        %2086 = vrot.lane.b32.xlu0 %v2029, 118
        %v2087 = vpop.permute.xlu0 %2086
        %2088 = vrot.lane.b32.xlu0 %v2030, 118
        %v2089 = vpop.permute.xlu0 %2088
        %2090 = vrot.lane.b32.xlu0 %v2031, 118
        %v2091 = vpop.permute.xlu0 %2090
        %2096 = vrot.lane.b32.xlu0 %v2028, 116
        %v2097 = vpop.permute.xlu0 %2096
        %2098 = vrot.lane.b32.xlu0 %v2029, 116
        %v2099 = vpop.permute.xlu0 %2098
        %2100 = vrot.lane.b32.xlu0 %v2030, 116
        %v2101 = vpop.permute.xlu0 %2100
        %2102 = vrot.lane.b32.xlu0 %v2031, 116
        %v2103 = vpop.permute.xlu0 %2102
        %2108 = vrot.lane.b32.xlu0 %v2028, 114
        %v2109 = vpop.permute.xlu0 %2108
        %2110 = vrot.lane.b32.xlu0 %v2029, 114
        %v2111 = vpop.permute.xlu0 %2110
        %2112 = vrot.lane.b32.xlu0 %v2030, 114
        %v2113 = vpop.permute.xlu0 %2112
        %2114 = vrot.lane.b32.xlu0 %v2031, 114
        %v2115 = vpop.permute.xlu0 %2114
        %v2120 = vcombine.low %v2028, %v2049
        %v2122 = vunpack.c.l.s4 1983009808
        %v2123 = vunpack.c.0.s8 %v2122
        %v2124 = vlaneseq
        %v2125 = vshrl.u32 %v2124, 7
        %v2126 = vsub.s32 %v2123, %v2125
        %v2127 = vrot.slane %v2120, %v2126
        %v2128 = vcombine.low %v2037, %v2061
        %v2130 = vunpack.c.l.s4 1983009808
        %v2131 = vunpack.c.0.s8 %v2130
        %v2132 = vlaneseq
        %v2133 = vshrl.u32 %v2132, 7
        %v2134 = vsub.s32 %v2131, %v2133
        %v2135 = vrot.slane %v2128, %v2134
        %v2136 = vcombine.low %v2073, %v2097
        %v2138 = vunpack.c.l.s4 1983009808
        %v2139 = vunpack.c.0.s8 %v2138
        %v2140 = vlaneseq
        %v2141 = vshrl.u32 %v2140, 7
        %v2142 = vsub.s32 %v2139, %v2141
        %v2143 = vrot.slane %v2136, %v2142
        %v2144 = vcombine.low %v2085, %v2109
        %v2146 = vunpack.c.l.s4 1983009808
        %v2147 = vunpack.c.0.s8 %v2146
        %v2148 = vlaneseq
        %v2149 = vshrl.u32 %v2148, 7
        %v2150 = vsub.s32 %v2147, %v2149
        %v2151 = vrot.slane %v2144, %v2150
        %v2152 = vcombine.low %v2127, %v2135
        %v2154 = vunpack.c.l.s4 1934713408
        %v2155 = vunpack.c.0.s8 %v2154
        %v2156 = vlaneseq
        %v2157 = vshrl.u32 %v2156, 7
        %v2158 = vsub.s32 %v2155, %v2157
        %v2159 = vrot.slane %v2152, %v2158
        %v2160 = vcombine.low %v2143, %v2151
        %v2162 = vunpack.c.l.s4 1934713408
        %v2163 = vunpack.c.0.s8 %v2162
        %v2164 = vlaneseq
        %v2165 = vshrl.u32 %v2164, 7
        %v2166 = vsub.s32 %v2163, %v2165
        %v2167 = vrot.slane %v2160, %v2166
        %v2168 = vcombine.low %v2159, %v2167
        %v2169 = vcombine.high %v2159, %v2167
        %v2170 = vcombine.low %v2029, %v2051
        %v2172 = vunpack.c.l.s4 1983009808
        %v2173 = vunpack.c.0.s8 %v2172
        %v2174 = vlaneseq
        %v2175 = vshrl.u32 %v2174, 7
        %v2176 = vsub.s32 %v2173, %v2175
        %v2177 = vrot.slane %v2170, %v2176
        %v2178 = vcombine.low %v2039, %v2063
        %v2180 = vunpack.c.l.s4 1983009808
        %v2181 = vunpack.c.0.s8 %v2180
        %v2182 = vlaneseq
        %v2183 = vshrl.u32 %v2182, 7
        %v2184 = vsub.s32 %v2181, %v2183
        %v2185 = vrot.slane %v2178, %v2184
        %v2186 = vcombine.low %v2075, %v2099
        %v2188 = vunpack.c.l.s4 1983009808
        %v2189 = vunpack.c.0.s8 %v2188
        %v2190 = vlaneseq
        %v2191 = vshrl.u32 %v2190, 7
        %v2192 = vsub.s32 %v2189, %v2191
        %v2193 = vrot.slane %v2186, %v2192
        %v2194 = vcombine.low %v2087, %v2111
        %v2196 = vunpack.c.l.s4 1983009808
        %v2197 = vunpack.c.0.s8 %v2196
        %v2198 = vlaneseq
        %v2199 = vshrl.u32 %v2198, 7
        %v2200 = vsub.s32 %v2197, %v2199
        %v2201 = vrot.slane %v2194, %v2200
        %v2202 = vcombine.low %v2177, %v2185
        %v2204 = vunpack.c.l.s4 1934713408
        %v2205 = vunpack.c.0.s8 %v2204
        %v2206 = vlaneseq
        %v2207 = vshrl.u32 %v2206, 7
        %v2208 = vsub.s32 %v2205, %v2207
        %v2209 = vrot.slane %v2202, %v2208
        %v2210 = vcombine.low %v2193, %v2201
        %v2212 = vunpack.c.l.s4 1934713408
        %v2213 = vunpack.c.0.s8 %v2212
        %v2214 = vlaneseq
        %v2215 = vshrl.u32 %v2214, 7
        %v2216 = vsub.s32 %v2213, %v2215
        %v2217 = vrot.slane %v2210, %v2216
        %v2218 = vcombine.low %v2209, %v2217
        %v2219 = vcombine.high %v2209, %v2217
        %v2220 = vcombine.low %v2030, %v2053
        %v2222 = vunpack.c.l.s4 1983009808
        %v2223 = vunpack.c.0.s8 %v2222
        %v2224 = vlaneseq
        %v2225 = vshrl.u32 %v2224, 7
        %v2226 = vsub.s32 %v2223, %v2225
        %v2227 = vrot.slane %v2220, %v2226
        %v2228 = vcombine.low %v2041, %v2065
        %v2230 = vunpack.c.l.s4 1983009808
        %v2231 = vunpack.c.0.s8 %v2230
        %v2232 = vlaneseq
        %v2233 = vshrl.u32 %v2232, 7
        %v2234 = vsub.s32 %v2231, %v2233
        %v2235 = vrot.slane %v2228, %v2234
        %v2236 = vcombine.low %v2077, %v2101
        %v2238 = vunpack.c.l.s4 1983009808
        %v2239 = vunpack.c.0.s8 %v2238
        %v2240 = vlaneseq
        %v2241 = vshrl.u32 %v2240, 7
        %v2242 = vsub.s32 %v2239, %v2241
        %v2243 = vrot.slane %v2236, %v2242
        %v2244 = vcombine.low %v2089, %v2113
        %v2246 = vunpack.c.l.s4 1983009808
        %v2247 = vunpack.c.0.s8 %v2246
        %v2248 = vlaneseq
        %v2249 = vshrl.u32 %v2248, 7
        %v2250 = vsub.s32 %v2247, %v2249
        %v2251 = vrot.slane %v2244, %v2250
        %v2252 = vcombine.low %v2227, %v2235
        %v2254 = vunpack.c.l.s4 1934713408
        %v2255 = vunpack.c.0.s8 %v2254
        %v2256 = vlaneseq
        %v2257 = vshrl.u32 %v2256, 7
        %v2258 = vsub.s32 %v2255, %v2257
        %v2259 = vrot.slane %v2252, %v2258
        %v2260 = vcombine.low %v2243, %v2251
        %v2262 = vunpack.c.l.s4 1934713408
        %v2263 = vunpack.c.0.s8 %v2262
        %v2264 = vlaneseq
        %v2265 = vshrl.u32 %v2264, 7
        %v2266 = vsub.s32 %v2263, %v2265
        %v2267 = vrot.slane %v2260, %v2266
        %v2268 = vcombine.low %v2259, %v2267
        %v2269 = vcombine.high %v2259, %v2267
        %v2270 = vcombine.low %v2031, %v2055
        %v2272 = vunpack.c.l.s4 1983009808
        %v2273 = vunpack.c.0.s8 %v2272
        %v2274 = vlaneseq
        %v2275 = vshrl.u32 %v2274, 7
        %v2276 = vsub.s32 %v2273, %v2275
        %v2277 = vrot.slane %v2270, %v2276
        %v2278 = vcombine.low %v2043, %v2067
        %v2280 = vunpack.c.l.s4 1983009808
        %v2281 = vunpack.c.0.s8 %v2280
        %v2282 = vlaneseq
        %v2283 = vshrl.u32 %v2282, 7
        %v2284 = vsub.s32 %v2281, %v2283
        %v2285 = vrot.slane %v2278, %v2284
        %v2286 = vcombine.low %v2079, %v2103
        %v2288 = vunpack.c.l.s4 1983009808
        %v2289 = vunpack.c.0.s8 %v2288
        %v2290 = vlaneseq
        %v2291 = vshrl.u32 %v2290, 7
        %v2292 = vsub.s32 %v2289, %v2291
        %v2293 = vrot.slane %v2286, %v2292
        %v2294 = vcombine.low %v2091, %v2115
        %v2296 = vunpack.c.l.s4 1983009808
        %v2297 = vunpack.c.0.s8 %v2296
        %v2298 = vlaneseq
        %v2299 = vshrl.u32 %v2298, 7
        %v2300 = vsub.s32 %v2297, %v2299
        %v2301 = vrot.slane %v2294, %v2300
        %v2302 = vcombine.low %v2277, %v2285
        %v2304 = vunpack.c.l.s4 1934713408
        %v2305 = vunpack.c.0.s8 %v2304
        %v2306 = vlaneseq
        %v2307 = vshrl.u32 %v2306, 7
        %v2308 = vsub.s32 %v2305, %v2307
        %v2309 = vrot.slane %v2302, %v2308
        %v2310 = vcombine.low %v2293, %v2301
        %v2312 = vunpack.c.l.s4 1934713408
        %v2313 = vunpack.c.0.s8 %v2312
        %v2314 = vlaneseq
        %v2315 = vshrl.u32 %v2314, 7
        %v2316 = vsub.s32 %v2313, %v2315
        %v2317 = vrot.slane %v2310, %v2316
        %v2318 = vcombine.low %v2309, %v2317
        %v2319 = vcombine.high %v2309, %v2317
        %v2320 = vsel %vm1520, %v2168, 0.0
        %v2321 = vsel %vm1520, %v2169, 0.0
        %v2322 = vadd.f32 %v2320, %v2321
        %2323 = vadd.xlane.f32.xlu0 %v2322
        %v2324 = vpop.xlane.xlu0 %2323
        %v2325 = vsel %vm1520, %v2218, 0.0
        %v2326 = vsel %vm1520, %v2219, 0.0
        %v2327 = vadd.f32 %v2325, %v2326
        %2328 = vadd.xlane.f32.xlu0 %v2327
        %v2329 = vpop.xlane.xlu0 %2328
        %v2330 = vsel %vm1520, %v2268, 0.0
        %v2331 = vsel %vm1520, %v2269, 0.0
        %v2332 = vadd.f32 %v2330, %v2331
        %2333 = vadd.xlane.f32.xlu0 %v2332
        %v2334 = vpop.xlane.xlu0 %2333
        %v2335 = vsel %vm1520, %v2318, 0.0
        %v2336 = vsel %vm1520, %v2319, 0.0
        %v2337 = vadd.f32 %v2335, %v2336
        %2338 = vadd.xlane.f32.xlu0 %v2337
        %v2339 = vpop.xlane.xlu0 %2338
        %v2340 = vmul.f32 %v2324, 0.25
        %v2341 = vmul.f32 %v2329, 0.25
        %v2342 = vmul.f32 %v2334, 0.25
        %v2343 = vmul.f32 %v2339, 0.25
        %s2344 = sadd.s32 %s246, 16
        %p2345 = scmp.lt.s32.totalorder %s2344, 14
        %s2346 = scalar_select %p2345, %s2344, 14
        %s2347 = scalar_lea.vmem %s207, %s2346 [#allocation4]
        %v2348 = vld [vmem:[%s2347] sm:$0x3]
        %v2349 = vld [vmem:[%s2347 + $0x10] sm:$0x3]
        %v2350 = vld [vmem:[%s2347 + $0x20] sm:$0x3]
        %v2351 = vld [vmem:[%s2347 + $0x30] sm:$0x3]
        %2356 = vrot.lane.b32.xlu0 %v2348, 126
        %v2357 = vpop.permute.xlu0 %2356
        %2358 = vrot.lane.b32.xlu0 %v2349, 126
        %v2359 = vpop.permute.xlu0 %2358
        %2360 = vrot.lane.b32.xlu0 %v2350, 126
        %v2361 = vpop.permute.xlu0 %2360
        %2362 = vrot.lane.b32.xlu0 %v2351, 126
        %v2363 = vpop.permute.xlu0 %2362
        %2368 = vrot.lane.b32.xlu0 %v2348, 124
        %v2369 = vpop.permute.xlu0 %2368
        %2370 = vrot.lane.b32.xlu0 %v2349, 124
        %v2371 = vpop.permute.xlu0 %2370
        %2372 = vrot.lane.b32.xlu0 %v2350, 124
        %v2373 = vpop.permute.xlu0 %2372
        %2374 = vrot.lane.b32.xlu0 %v2351, 124
        %v2375 = vpop.permute.xlu0 %2374
        %2380 = vrot.lane.b32.xlu0 %v2348, 122
        %v2381 = vpop.permute.xlu0 %2380
        %2382 = vrot.lane.b32.xlu0 %v2349, 122
        %v2383 = vpop.permute.xlu0 %2382
        %2384 = vrot.lane.b32.xlu0 %v2350, 122
        %v2385 = vpop.permute.xlu0 %2384
        %2386 = vrot.lane.b32.xlu0 %v2351, 122
        %v2387 = vpop.permute.xlu0 %2386
        %2392 = vrot.lane.b32.xlu0 %v2348, 120
        %v2393 = vpop.permute.xlu0 %2392
        %2394 = vrot.lane.b32.xlu0 %v2349, 120
        %v2395 = vpop.permute.xlu0 %2394
        %2396 = vrot.lane.b32.xlu0 %v2350, 120
        %v2397 = vpop.permute.xlu0 %2396
        %2398 = vrot.lane.b32.xlu0 %v2351, 120
        %v2399 = vpop.permute.xlu0 %2398
        %2404 = vrot.lane.b32.xlu0 %v2348, 118
        %v2405 = vpop.permute.xlu0 %2404
        %2406 = vrot.lane.b32.xlu0 %v2349, 118
        %v2407 = vpop.permute.xlu0 %2406
        %2408 = vrot.lane.b32.xlu0 %v2350, 118
        %v2409 = vpop.permute.xlu0 %2408
        %2410 = vrot.lane.b32.xlu0 %v2351, 118
        %v2411 = vpop.permute.xlu0 %2410
        %2416 = vrot.lane.b32.xlu0 %v2348, 116
        %v2417 = vpop.permute.xlu0 %2416
        %2418 = vrot.lane.b32.xlu0 %v2349, 116
        %v2419 = vpop.permute.xlu0 %2418
        %2420 = vrot.lane.b32.xlu0 %v2350, 116
        %v2421 = vpop.permute.xlu0 %2420
        %2422 = vrot.lane.b32.xlu0 %v2351, 116
        %v2423 = vpop.permute.xlu0 %2422
        %2428 = vrot.lane.b32.xlu0 %v2348, 114
        %v2429 = vpop.permute.xlu0 %2428
        %2430 = vrot.lane.b32.xlu0 %v2349, 114
        %v2431 = vpop.permute.xlu0 %2430
        %2432 = vrot.lane.b32.xlu0 %v2350, 114
        %v2433 = vpop.permute.xlu0 %2432
        %2434 = vrot.lane.b32.xlu0 %v2351, 114
        %v2435 = vpop.permute.xlu0 %2434
        %v2440 = vcombine.low %v2348, %v2369
        %v2442 = vunpack.c.l.s4 1983009808
        %v2443 = vunpack.c.0.s8 %v2442
        %v2444 = vlaneseq
        %v2445 = vshrl.u32 %v2444, 7
        %v2446 = vsub.s32 %v2443, %v2445
        %v2447 = vrot.slane %v2440, %v2446
        %v2448 = vcombine.low %v2357, %v2381
        %v2450 = vunpack.c.l.s4 1983009808
        %v2451 = vunpack.c.0.s8 %v2450
        %v2452 = vlaneseq
        %v2453 = vshrl.u32 %v2452, 7
        %v2454 = vsub.s32 %v2451, %v2453
        %v2455 = vrot.slane %v2448, %v2454
        %v2456 = vcombine.low %v2393, %v2417
        %v2458 = vunpack.c.l.s4 1983009808
        %v2459 = vunpack.c.0.s8 %v2458
        %v2460 = vlaneseq
        %v2461 = vshrl.u32 %v2460, 7
        %v2462 = vsub.s32 %v2459, %v2461
        %v2463 = vrot.slane %v2456, %v2462
        %v2464 = vcombine.low %v2405, %v2429
        %v2466 = vunpack.c.l.s4 1983009808
        %v2467 = vunpack.c.0.s8 %v2466
        %v2468 = vlaneseq
        %v2469 = vshrl.u32 %v2468, 7
        %v2470 = vsub.s32 %v2467, %v2469
        %v2471 = vrot.slane %v2464, %v2470
        %v2472 = vcombine.low %v2447, %v2455
        %v2474 = vunpack.c.l.s4 1934713408
        %v2475 = vunpack.c.0.s8 %v2474
        %v2476 = vlaneseq
        %v2477 = vshrl.u32 %v2476, 7
        %v2478 = vsub.s32 %v2475, %v2477
        %v2479 = vrot.slane %v2472, %v2478
        %v2480 = vcombine.low %v2463, %v2471
        %v2482 = vunpack.c.l.s4 1934713408
        %v2483 = vunpack.c.0.s8 %v2482
        %v2484 = vlaneseq
        %v2485 = vshrl.u32 %v2484, 7
        %v2486 = vsub.s32 %v2483, %v2485
        %v2487 = vrot.slane %v2480, %v2486
        %v2488 = vcombine.low %v2479, %v2487
        %v2489 = vcombine.high %v2479, %v2487
        %v2490 = vcombine.low %v2349, %v2371
        %v2492 = vunpack.c.l.s4 1983009808
        %v2493 = vunpack.c.0.s8 %v2492
        %v2494 = vlaneseq
        %v2495 = vshrl.u32 %v2494, 7
        %v2496 = vsub.s32 %v2493, %v2495
        %v2497 = vrot.slane %v2490, %v2496
        %v2498 = vcombine.low %v2359, %v2383
        %v2500 = vunpack.c.l.s4 1983009808
        %v2501 = vunpack.c.0.s8 %v2500
        %v2502 = vlaneseq
        %v2503 = vshrl.u32 %v2502, 7
        %v2504 = vsub.s32 %v2501, %v2503
        %v2505 = vrot.slane %v2498, %v2504
        %v2506 = vcombine.low %v2395, %v2419
        %v2508 = vunpack.c.l.s4 1983009808
        %v2509 = vunpack.c.0.s8 %v2508
        %v2510 = vlaneseq
        %v2511 = vshrl.u32 %v2510, 7
        %v2512 = vsub.s32 %v2509, %v2511
        %v2513 = vrot.slane %v2506, %v2512
        %v2514 = vcombine.low %v2407, %v2431
        %v2516 = vunpack.c.l.s4 1983009808
        %v2517 = vunpack.c.0.s8 %v2516
        %v2518 = vlaneseq
        %v2519 = vshrl.u32 %v2518, 7
        %v2520 = vsub.s32 %v2517, %v2519
        %v2521 = vrot.slane %v2514, %v2520
        %v2522 = vcombine.low %v2497, %v2505
        %v2524 = vunpack.c.l.s4 1934713408
        %v2525 = vunpack.c.0.s8 %v2524
        %v2526 = vlaneseq
        %v2527 = vshrl.u32 %v2526, 7
        %v2528 = vsub.s32 %v2525, %v2527
        %v2529 = vrot.slane %v2522, %v2528
        %v2530 = vcombine.low %v2513, %v2521
        %v2532 = vunpack.c.l.s4 1934713408
        %v2533 = vunpack.c.0.s8 %v2532
        %v2534 = vlaneseq
        %v2535 = vshrl.u32 %v2534, 7
        %v2536 = vsub.s32 %v2533, %v2535
        %v2537 = vrot.slane %v2530, %v2536
        %v2538 = vcombine.low %v2529, %v2537
        %v2539 = vcombine.high %v2529, %v2537
        %v2540 = vcombine.low %v2350, %v2373
        %v2542 = vunpack.c.l.s4 1983009808
        %v2543 = vunpack.c.0.s8 %v2542
        %v2544 = vlaneseq
        %v2545 = vshrl.u32 %v2544, 7
        %v2546 = vsub.s32 %v2543, %v2545
        %v2547 = vrot.slane %v2540, %v2546
        %v2548 = vcombine.low %v2361, %v2385
        %v2550 = vunpack.c.l.s4 1983009808
        %v2551 = vunpack.c.0.s8 %v2550
        %v2552 = vlaneseq
        %v2553 = vshrl.u32 %v2552, 7
        %v2554 = vsub.s32 %v2551, %v2553
        %v2555 = vrot.slane %v2548, %v2554
        %v2556 = vcombine.low %v2397, %v2421
        %v2558 = vunpack.c.l.s4 1983009808
        %v2559 = vunpack.c.0.s8 %v2558
        %v2560 = vlaneseq
        %v2561 = vshrl.u32 %v2560, 7
        %v2562 = vsub.s32 %v2559, %v2561
        %v2563 = vrot.slane %v2556, %v2562
        %v2564 = vcombine.low %v2409, %v2433
        %v2566 = vunpack.c.l.s4 1983009808
        %v2567 = vunpack.c.0.s8 %v2566
        %v2568 = vlaneseq
        %v2569 = vshrl.u32 %v2568, 7
        %v2570 = vsub.s32 %v2567, %v2569
        %v2571 = vrot.slane %v2564, %v2570
        %v2572 = vcombine.low %v2547, %v2555
        %v2574 = vunpack.c.l.s4 1934713408
        %v2575 = vunpack.c.0.s8 %v2574
        %v2576 = vlaneseq
        %v2577 = vshrl.u32 %v2576, 7
        %v2578 = vsub.s32 %v2575, %v2577
        %v2579 = vrot.slane %v2572, %v2578
        %v2580 = vcombine.low %v2563, %v2571
        %v2582 = vunpack.c.l.s4 1934713408
        %v2583 = vunpack.c.0.s8 %v2582
        %v2584 = vlaneseq
        %v2585 = vshrl.u32 %v2584, 7
        %v2586 = vsub.s32 %v2583, %v2585
        %v2587 = vrot.slane %v2580, %v2586
        %v2588 = vcombine.low %v2579, %v2587
        %v2589 = vcombine.high %v2579, %v2587
        %v2590 = vcombine.low %v2351, %v2375
        %v2592 = vunpack.c.l.s4 1983009808
        %v2593 = vunpack.c.0.s8 %v2592
        %v2594 = vlaneseq
        %v2595 = vshrl.u32 %v2594, 7
        %v2596 = vsub.s32 %v2593, %v2595
        %v2597 = vrot.slane %v2590, %v2596
        %v2598 = vcombine.low %v2363, %v2387
        %v2600 = vunpack.c.l.s4 1983009808
        %v2601 = vunpack.c.0.s8 %v2600
        %v2602 = vlaneseq
        %v2603 = vshrl.u32 %v2602, 7
        %v2604 = vsub.s32 %v2601, %v2603
        %v2605 = vrot.slane %v2598, %v2604
        %v2606 = vcombine.low %v2399, %v2423
        %v2608 = vunpack.c.l.s4 1983009808
        %v2609 = vunpack.c.0.s8 %v2608
        %v2610 = vlaneseq
        %v2611 = vshrl.u32 %v2610, 7
        %v2612 = vsub.s32 %v2609, %v2611
        %v2613 = vrot.slane %v2606, %v2612
        %v2614 = vcombine.low %v2411, %v2435
        %v2616 = vunpack.c.l.s4 1983009808
        %v2617 = vunpack.c.0.s8 %v2616
        %v2618 = vlaneseq
        %v2619 = vshrl.u32 %v2618, 7
        %v2620 = vsub.s32 %v2617, %v2619
        %v2621 = vrot.slane %v2614, %v2620
        %v2622 = vcombine.low %v2597, %v2605
        %v2624 = vunpack.c.l.s4 1934713408
        %v2625 = vunpack.c.0.s8 %v2624
        %v2626 = vlaneseq
        %v2627 = vshrl.u32 %v2626, 7
        %v2628 = vsub.s32 %v2625, %v2627
        %v2629 = vrot.slane %v2622, %v2628
        %v2630 = vcombine.low %v2613, %v2621
        %v2632 = vunpack.c.l.s4 1934713408
        %v2633 = vunpack.c.0.s8 %v2632
        %v2634 = vlaneseq
        %v2635 = vshrl.u32 %v2634, 7
        %v2636 = vsub.s32 %v2633, %v2635
        %v2637 = vrot.slane %v2630, %v2636
        %v2638 = vcombine.low %v2629, %v2637
        %v2639 = vcombine.high %v2629, %v2637
        %v2640 = vsel %vm1520, %v2488, 0.0
        %v2641 = vsel %vm1520, %v2489, 0.0
        %v2642 = vadd.f32 %v2640, %v2641
        %2643 = vadd.xlane.f32.xlu0 %v2642
        %v2644 = vpop.xlane.xlu0 %2643
        %v2645 = vsel %vm1520, %v2538, 0.0
        %v2646 = vsel %vm1520, %v2539, 0.0
        %v2647 = vadd.f32 %v2645, %v2646
        %2648 = vadd.xlane.f32.xlu0 %v2647
        %v2649 = vpop.xlane.xlu0 %2648
        %v2650 = vsel %vm1520, %v2588, 0.0
        %v2651 = vsel %vm1520, %v2589, 0.0
        %v2652 = vadd.f32 %v2650, %v2651
        %2653 = vadd.xlane.f32.xlu0 %v2652
        %v2654 = vpop.xlane.xlu0 %2653
        %v2655 = vsel %vm1520, %v2638, 0.0
        %v2656 = vsel %vm1520, %v2639, 0.0
        %v2657 = vadd.f32 %v2655, %v2656
        %2658 = vadd.xlane.f32.xlu0 %v2657
        %v2659 = vpop.xlane.xlu0 %2658
        %v2660 = vmul.f32 %v2644, 0.25
        %v2661 = vmul.f32 %v2649, 0.25
        %v2662 = vmul.f32 %v2654, 0.25
        %v2663 = vmul.f32 %v2659, 0.25
        %p2664 = scmp.gt.s32.totalorder %s27, 0
        %s2665 = scalar_select %p2664, 1, 0
        %s2666 = scvt.s32.f32 %s2665
        %v2667 = vstv %s2666
        %v2668 = vmul.f32 %v2340, %v2667
        %v2669 = vmul.f32 %v2341, %v2667
        %v2670 = vmul.f32 %v2342, %v2667
        %v2671 = vmul.f32 %v2343, %v2667
        %p2672 = scmp.lt.s32.totalorder %s27, 0
        %s2673 = scalar_select %p2672, 1, 0
        %s2674 = scvt.s32.f32 %s2673
        %v2675 = vstv %s2674
        %v2676 = vmul.f32 %v2660, %v2675
        %v2677 = vmul.f32 %v2661, %v2675
        %v2678 = vmul.f32 %v2662, %v2675
        %v2679 = vmul.f32 %v2663, %v2675
        %vm2680 = vcmask 3072
        %2681 = vst.msk [vmem:[#allocation2] sm:$0xf] %vm2680, 0.0
        %v2686 = vadd.s32 %v1746, 4294967295
        %v2687 = vlaneseq
        %v2688 = vshrl.u32 %v2687, 7
        %v2689 = vsub.s32 %v2686, %v2688
        %v2690 = vrot.slane %v2668, %v2689
        %v2691 = vlaneseq
        %v2692 = vshrl.u32 %v2691, 7
        %v2693 = vsub.s32 %v2686, %v2692
        %v2694 = vrot.slane %v2669, %v2693
        %v2695 = vlaneseq
        %v2696 = vshrl.u32 %v2695, 7
        %v2697 = vsub.s32 %v2686, %v2696
        %v2698 = vrot.slane %v2670, %v2697
        %v2699 = vlaneseq
        %v2700 = vshrl.u32 %v2699, 7
        %v2701 = vsub.s32 %v2686, %v2700
        %v2702 = vrot.slane %v2671, %v2701
        %v2703 = vsel %vm1875, %v2694, %v2690
        %v2704 = vsel %vm1877, %v2698, %v2703
        %v2705 = vsel %vm1879, %v2702, %v2704
        %vm2707 = vcmask 68616
        %2708 = vst.msk [vmem:[#allocation2] sm:$0xf] %vm2707, %v2705
        %2710 = vrot.lane.b32.xlu0 %v2023, 9
        %v2711 = vpop.permute.xlu0 %2710
        %vm2713 = vcmask 592968
        %2714 = vst.msk [vmem:[#allocation2] sm:$0xf] %vm2713, %v2711
        %v2719 = vadd.s32 %v1746, 4294967223
        %v2720 = vlaneseq
        %v2721 = vshrl.u32 %v2720, 7
        %v2722 = vsub.s32 %v2719, %v2721
        %v2723 = vrot.slane %v2676, %v2722
        %v2724 = vlaneseq
        %v2725 = vshrl.u32 %v2724, 7
        %v2726 = vsub.s32 %v2719, %v2725
        %v2727 = vrot.slane %v2677, %v2726
        %v2728 = vlaneseq
        %v2729 = vshrl.u32 %v2728, 7
        %v2730 = vsub.s32 %v2719, %v2729
        %v2731 = vrot.slane %v2678, %v2730
        %v2732 = vlaneseq
        %v2733 = vshrl.u32 %v2732, 7
        %v2734 = vsub.s32 %v2719, %v2733
        %v2735 = vrot.slane %v2679, %v2734
        %v2736 = vsel %vm1875, %v2727, %v2723
        %v2737 = vsel %vm1877, %v2731, %v2736
        %v2738 = vsel %vm1879, %v2735, %v2737
        %vm2740 = vcmask 659016
        %2741 = vst.msk [vmem:[#allocation2] sm:$0xf] %vm2740, %v2738
        %vm2742 = vcmask 667272
        %2743 = vst.msk [vmem:[#allocation2] sm:$0xf] %vm2742, 0.0
        %v2744 = vcombine.high %v1746, 0
        %v2746 = vunpack.c.l.s4 1983009808
        %v2747 = vunpack.c.0.s8 %v2746
        %v2748 = vlaneseq
        %v2749 = vshrl.u32 %v2748, 7
        %v2750 = vsub.s32 %v2747, %v2749
        %v2751 = vrot.slane %v1746, %v2750
        %v2753 = vunpack.c.l.s4 1983009808
        %v2754 = vunpack.c.0.s8 %v2753
        %v2755 = vlaneseq
        %v2756 = vshrl.u32 %v2755, 7
        %v2757 = vsub.s32 %v2754, %v2756
        %v2758 = vrot.slane %v2744, %v2757
        %v2759 = vcombine.high %v2751, 0
        %v2761 = vunpack.c.l.s4 1934713408
        %v2762 = vunpack.c.0.s8 %v2761
        %v2763 = vlaneseq
        %v2764 = vshrl.u32 %v2763, 7
        %v2765 = vsub.s32 %v2762, %v2764
        %v2766 = vrot.slane %v2751, %v2765
        %v2768 = vunpack.c.l.s4 1934713408
        %v2769 = vunpack.c.0.s8 %v2768
        %v2770 = vlaneseq
        %v2771 = vshrl.u32 %v2770, 7
        %v2772 = vsub.s32 %v2769, %v2771
        %v2773 = vrot.slane %v2759, %v2772
        %v2774 = vcombine.high %v2758, 0
        %v2776 = vunpack.c.l.s4 1934713408
        %v2777 = vunpack.c.0.s8 %v2776
        %v2778 = vlaneseq
        %v2779 = vshrl.u32 %v2778, 7
        %v2780 = vsub.s32 %v2777, %v2779
        %v2781 = vrot.slane %v2758, %v2780
        %v2783 = vunpack.c.l.s4 1934713408
        %v2784 = vunpack.c.0.s8 %v2783
        %v2785 = vlaneseq
        %v2786 = vshrl.u32 %v2785, 7
        %v2787 = vsub.s32 %v2784, %v2786
        %v2788 = vrot.slane %v2774, %v2787
        %v2789 = vcombine.high %v2766, 0
        %v2790 = vcombine.high %v2773, 0
        %v2791 = vcombine.high %v2781, 0
        %v2792 = vcombine.high %v2788, 0
        %2793 = vrot.lane.b32.xlu0 %v2789, 8
        %v2794 = vpop.permute.xlu0 %2793
        %2795 = vrot.lane.b32.xlu0 %v2773, 16
        %v2796 = vpop.permute.xlu0 %2795
        %2797 = vrot.lane.b32.xlu0 %v2790, 24
        %v2798 = vpop.permute.xlu0 %2797
        %2799 = vrot.lane.b32.xlu0 %v2781, 32
        %v2800 = vpop.permute.xlu0 %2799
        %2801 = vrot.lane.b32.xlu0 %v2791, 40
        %v2802 = vpop.permute.xlu0 %2801
        %2803 = vrot.lane.b32.xlu0 %v2788, 48
        %v2804 = vpop.permute.xlu0 %2803
        %2805 = vrot.lane.b32.xlu0 %v2792, 56
        %v2806 = vpop.permute.xlu0 %2805
        %v2807 = vsel %vm2010, %v2766, %v2794
        %v2808 = vsel %vm2012, %v2807, %v2796
        %v2809 = vsel %vm2014, %v2808, %v2798
        %v2810 = vsel %vm2016, %v2809, %v2800
        %v2811 = vsel %vm2018, %v2810, %v2802
        %v2812 = vsel %vm2020, %v2811, %v2804
        %v2813 = vsel %vm2022, %v2812, %v2806
        %v2814 = vld [vmem:[#allocation2] sm:$0xf]
        %vm2815 = vcmp.ne.s32.totalorder %v2813, 0
        %v2816 = vsel %vm2815, 1, 0
        %v2817 = vlaneseq
        %v2818 = vshrl.u32 %v2817, 7
        %v2819 = vsub.s32 0, %v2818
        %v2820 = vrot.slane %v2816, %v2819
        %vm2821 = vcmp.eq.s32.totalorder %v2820, 1
        %v2822 = vsel %vm2821, %v2814, 0.0
        %vm2823 = vcmask 519168
        %2824 = vst.msk [vmem:[#allocation3] sm:$0xf] %vm2823, %v2822
        %v2825 = vld [vmem:[#allocation2] sm:$0xf]
        %2827 = vrot.lane.b32.xlu0 %v2825, 127
        %v2828 = vpop.permute.xlu0 %2827
        %2830 = vst.msk [vmem:[#allocation3 + $0x4] sm:$0xf] %vm2823, %v2828
        %v2831 = vld [vmem:[#allocation2] sm:$0xf]
        %vm2832 = vcmp.ne.s32.totalorder %v2813, 7
        %v2833 = vsel %vm2832, 1, 0
        %v2834 = vlaneseq
        %v2835 = vshrl.u32 %v2834, 7
        %v2836 = vsub.s32 0, %v2835
        %v2837 = vrot.slane %v2833, %v2836
        %vm2838 = vcmp.eq.s32.totalorder %v2837, 1
        %2840 = vrot.lane.b32.xlu0 %v2831, 126
        %v2841 = vpop.permute.xlu0 %2840
        %v2843 = vsel %vm2838, %v2841, 0.0
        %2844 = vst.msk [vmem:[#allocation3 + $0x8] sm:$0xf] %vm2823, %v2843
        %v2845 = vld [vmem:[#allocation2] sm:$0xf]
        %2847 = vrot.lane.b32.xlu0 %v2845, 120
        %v2848 = vpop.permute.xlu0 %2847
        %v2850 = vsel %vm2821, %v2848, 0.0
        %2851 = vst.msk [vmem:[#allocation3 + $0xc] sm:$0xf] %vm2823, %v2850
        %v2852 = vld [vmem:[#allocation2] sm:$0xf]
        %2854 = vrot.lane.b32.xlu0 %v2852, 119
        %v2855 = vpop.permute.xlu0 %2854
        %2857 = vst.msk [vmem:[#allocation3 + $0x10] sm:$0xf] %vm2823, %v2855
        %v2858 = vld [vmem:[#allocation2] sm:$0xf]
        %2860 = vrot.lane.b32.xlu0 %v2858, 118
        %v2861 = vpop.permute.xlu0 %2860
        %v2863 = vsel %vm2838, %v2861, 0.0
        %2864 = vst.msk [vmem:[#allocation3 + $0x14] sm:$0xf] %vm2823, %v2863
        %v2865 = vld [vmem:[#allocation2] sm:$0xf]
        %2867 = vrot.lane.b32.xlu0 %v2865, 112
        %v2868 = vpop.permute.xlu0 %2867
        %v2870 = vsel %vm2821, %v2868, 0.0
        %2871 = vst.msk [vmem:[#allocation3 + $0x18] sm:$0xf] %vm2823, %v2870
        %v2872 = vld [vmem:[#allocation2] sm:$0xf]
        %2874 = vrot.lane.b32.xlu0 %v2872, 111
        %v2875 = vpop.permute.xlu0 %2874
        %2877 = vst.msk [vmem:[#allocation3 + $0x1c] sm:$0xf] %vm2823, %v2875
        %v2878 = vld [vmem:[#allocation2] sm:$0xf]
        %2880 = vrot.lane.b32.xlu0 %v2878, 110
        %v2881 = vpop.permute.xlu0 %2880
        %v2883 = vsel %vm2838, %v2881, 0.0
        %2884 = vst.msk [vmem:[#allocation3 + $0x20] sm:$0xf] %vm2823, %v2883
        %v2885 = vld [vmem:[%s241] sm:$0xff]
        %v2886 = vld [vmem:[#allocation3] sm:$0xff]
        %v2887 = vld [vmem:[#allocation3 + $0x8] sm:$0xff]
        %v2888 = vld [vmem:[#allocation3 + $0x10] sm:$0xff]
        %v2889 = vld [vmem:[#allocation3 + $0x18] sm:$0xff]
        %v2890 = vld [vmem:[#allocation3 + $0x20] sm:$0xf]
        %v2891 = vld [vmem:[%s245] sm:$0xff]
        %2893 = vset.pattern.permute.xlu0 0
        %2894 = vperm.xlu0 %2893, %v2891
        %v2895 = vpop.permute.xlu0 %2894
        %vm2897 = vcmask 293888
        %v2899 = vsel %vm2897, %v2885, 0
        %vm2901 = vcmask 1043456
        %v2903 = vsel %vm2901, %v2890, 0
        %2905 = vmatprep.subr.mxu0 0.0
        %2906 = vmatpush1.msra.mxu0 %v2886
        %2907 = vmatprep.subr.mxu0 0.0
        %2908 = vmatpush1.msra.mxu0 %v2887
        %2909 = vmatprep.subr.mxu0 0.0
        %2910 = vmatpush1.msra.mxu0 %v2888
        %2911 = vmatprep.subr.mxu0 0.0
        %2912 = vmatpush1.msra.mxu0 %v2889
        %2913 = vmatprep.subr.mxu0 0.0
        %2914 = vmatpush1.msra.mxu0 %v2903
        %2915 = vmatprep.subr.mxu0 0.0
        %2916 = vmatpush1.msra.mxu0 0.0
        %2917 = vmatprep.subr.mxu0 0.0
        %2918 = vmatpush1.msra.mxu0 0.0
        %2919 = vmatprep.subr.mxu0 0.0
        %2920 = vmatpush1.msra.mxu0 0.0
        %2921 = vmatprep.subr.mxu0 0.0
        %2922 = vmatpush1.msra.mxu0 0.0
        %2923 = vmatprep.subr.mxu0 0.0
        %2924 = vmatpush1.msra.mxu0 0.0
        %2925 = vmatprep.subr.mxu0 0.0
        %2926 = vmatpush1.msra.mxu0 0.0
        %2927 = vmatprep.subr.mxu0 0.0
        %2928 = vmatpush1.msra.mxu0 0.0
        %2929 = vmatprep.subr.mxu0 0.0
        %2930 = vmatpush1.msra.mxu0 0.0
        %2931 = vmatprep.subr.mxu0 0.0
        %2932 = vmatpush1.msra.mxu0 0.0
        %2933 = vmatprep.subr.mxu0 0.0
        %2934 = vmatpush1.msra.mxu0 0.0
        %2935 = vmatprep.subr.mxu0 0.0
        %2936 = vmatpush1.msra.mxu0 0.0
        %2937 = vmatprep.subr.mxu0 0.0
        %2938 = vmatpush1.msra.mxu0 0.0
        %2939 = vmatprep.subr.mxu0 0.0
        %2940 = vmatpush1.msra.mxu0 0.0
        %2941 = vmatprep.subr.mxu0 0.0
        %2942 = vmatpush1.msra.mxu0 0.0
        %2943 = vmatprep.subr.mxu0 0.0
        %2944 = vmatpush1.msra.mxu0 0.0
        %2945 = vmatprep.subr.mxu0 0.0
        %2946 = vmatpush1.msra.mxu0 0.0
        %2947 = vmatprep.subr.mxu0 0.0
        %2948 = vmatpush1.msra.mxu0 0.0
        %2949 = vmatprep.subr.mxu0 0.0
        %2950 = vmatpush1.msra.mxu0 0.0
        %2951 = vmatprep.subr.mxu0 0.0
        %2952 = vmatpush1.msra.mxu0 0.0
        %2953 = vmatprep.subr.mxu0 0.0
        %2954 = vmatpush1.msra.mxu0 0.0
        %2955 = vmatprep.subr.mxu0 0.0
        %2956 = vmatpush1.msra.mxu0 0.0
        %2957 = vmatprep.subr.mxu0 0.0
        %2958 = vmatpush1.msra.mxu0 0.0
        %2959 = vmatprep.subr.mxu0 0.0
        %2960 = vmatpush1.msra.mxu0 0.0
        %2961 = vmatprep.subr.mxu0 0.0
        %2962 = vmatpush1.msra.mxu0 0.0
        %2963 = vmatprep.subr.mxu0 0.0
        %2964 = vmatpush1.msra.mxu0 0.0
        %2965 = vmatprep.subr.mxu0 0.0
        %2966 = vmatpush1.msra.mxu0 0.0
        %2967 = vmatprep.subr.mxu0 0.0
        %2968 = vmatpush1.msra.mxu0 0.0
        %2969 = vmatprep.mubr.f32.mxu0 0.0
        %2970 = vmatmul.mubr.f32.gmra.mrb[0].mxu0 %v2899
        %v2971 = vpop.f32.mrb[0].mxu0
        %v2972 = vadd.f32 %v2895, %v2971
        %v2973 = vpop.f32.mrb[0].mxu0
        %2974 = vdwg.mxu0
        %vm2975 = vcmask 523264
        %2976 = vst.msk [vmem:[%s237] sm:$0xff] %vm2975, %v2972
        %s2977 = sand.u32 %s129, 1
        %s2978 = scalar_lea.sflag [#allocation6], %s2977
        %s2979 = sand.u32 %s129, 1
        %s2980 = smul.addr %s2979, 8
        %s2981 = scalar_lea.vmem [#allocation7], %s2980
        // Predicated region
        $region37: #{tpu_custom_call.1} parent=31 // pred_check
          %p2982 = pneg %p139
        $region38: #{tpu_custom_call.1} parent=31 // pred_check_branch
          %2984 = sbr.rel (%p2982) target = $region40
        $region39: #{tpu_custom_call.1} parent=31 // pred_region
          %s2986 = ssub.s32 128, 128
          %2987 = vsyncadd %s2978, %s2986
          %s2988 = sadd.s32 %s27, %s26
          %s2989 = sadd.s32 %s2988, %s25
          %s2990 = smul.addr %s2989, 128
          %s2991 = scalar_lea.hbm %s3, %s2990
          %s2993 = sshll.u32 %s2981, 4
          %s2994 = int_to_ptr.vmem [resolvable:$true] %s2993
          %2996 = dma.vmem_to_hbm [thread:$0]  %s2994, 128, %s2991, %s2978
        $region40: #{tpu_custom_call.1} parent=31 // pred_fallthru
          _
      $region32: #{tpu_custom_call.1} parent=5 // pred_fallthru
        _
      %p2997 = scmp.le.s32.totalorder 2, %s15
      // Predicated region
      $region41: #{tpu_custom_call.1} parent=5 // pred_check
        %p2998 = pneg %p2997
      $region42: #{tpu_custom_call.1} parent=5 // pred_check_branch
        %3000 = sbr.rel (%p2998) target = $region44
      $region43: #{tpu_custom_call.1} parent=5 // pred_region
        %s3001 = ssub.s32 %s15, 2
        // Predicated region
        $region45: #{tpu_custom_call.1} parent=43 // pred_check
          %p3002 = pneg %p145
        $region46: #{tpu_custom_call.1} parent=43 // pred_check_branch
          %3004 = sbr.rel (%p3002) target = $region48
        $region47: #{tpu_custom_call.1} parent=43 // pred_region
          %s3005 = sand.u32 %s130, 1
          %s3006 = scalar_lea.sflag [#allocation6], %s3005
          %s3007 = sand.u32 %s130, 1
          %s3008 = smul.addr %s3007, 8
          %s3009 = scalar_lea.vmem [#allocation7], %s3008
          %3010 = dma.done %s3006, 128
        $region48: #{tpu_custom_call.1} parent=43 // pred_fallthru
          _
      $region44: #{tpu_custom_call.1} parent=5 // pred_fallthru
        _
    $region6: #{tpu_custom_call.1} parent=1 // loop_footer
      %s19 = sadd.s32 1, %s15
    $region7: #{tpu_custom_call.1} parent=1 // loop_footer_branch
      %14 = sbr.rel target = $region3
    $region8: #{tpu_custom_call.1} parent=1 // loop_exit
      _
    %3011 = vsyncpa [#allocation5], 1
    %s3012 = scalar_lea.sflag [#allocation5], 1
    %3013 = vsyncpa %s3012, 1
    %3014 = vsyncpa [#allocation6], 1
    %s3015 = scalar_lea.sflag [#allocation6], 1
    %3016 = vsyncpa %s3015, 1

</llo_original>
